<compile_context>
chip_gen: v6e
topology: v6e:2x2x1
jax: 0.10.0
libtpu: 0.0.40
codegen_flags: <defaults>
</compile_context>

<pallas_src>
import functools
import math

import jax
import jax.numpy as jnp
from jax import lax
from jax.experimental import pallas as pl
from jax.experimental.pallas import tpu as pltpu


def transformer_block_kernel(x_ref, wqkv_ref, wo_ref, w_in_ref, b_in_ref,
                             w_out_ref, b_out_ref, o_ref, *,
                             act_type, num_heads, d_head):
    B_blk, S, D = x_ref.shape
    H = num_heads
    Hd = H * d_head

    # Residual path stays in f32; bf16 is used only for matmul operands.
    x = x_ref[...].astype(jnp.float32)                 # (B_blk, S, D)
    x2 = x.reshape(B_blk * S, D)                       # pack batch rows into MXU sublanes
    x2_b = x2.astype(jnp.bfloat16)

    # ---- fused QKV projection: one full-width (D x 3*H*d_head) MXU matmul ----
    # 1/sqrt(d_head) is already folded into the W_Q columns (wrapper).
    qkv = jnp.dot(x2_b, wqkv_ref[...], preferred_element_type=jnp.float32)
    qkv_b = qkv.astype(jnp.bfloat16)                   # bf16 operands for per-head matmuls

    # Causal mask, built once per grid step (hoisted out of the head loop).
    row = lax.broadcasted_iota(jnp.int32, (S, S), 0)
    col = lax.broadcasted_iota(jnp.int32, (S, S), 1)
    causal = col <= row

    # ---- per (batch-row, head) causal softmax attention ----
    # TODO(synk): for realistic S (>=512) switch to a flash-style key-block loop with online
    # max/sum instead of materializing the full (S, S) scores per head.
    z_rows = []
    for b in range(B_blk):
        q_b = qkv_b[b * S:(b + 1) * S, 0 * Hd:1 * Hd]          # (S, H*d_head)
        k_b = qkv_b[b * S:(b + 1) * S, 1 * Hd:2 * Hd]
        v_b = qkv_b[b * S:(b + 1) * S, 2 * Hd:3 * Hd]
        z_heads = []
        for h in range(H):
            q_h = q_b[:, h * d_head:(h + 1) * d_head]
            k_h = k_b[:, h * d_head:(h + 1) * d_head]
            v_h = v_b[:, h * d_head:(h + 1) * d_head]
            # scores[q, p] = sum_c q_h[q, c] * k_h[p, c]   (q @ k^T, no transpose)
            scores = lax.dot_general(q_h, k_h, (((1,), (1,)), ((), ())),
                                     preferred_element_type=jnp.float32)   # (S, S) f32
            masked = jnp.where(causal, scores, jnp.float32(-1e10))
            m = jnp.max(masked, axis=-1, keepdims=True)                    # f32 stats
            e = jnp.exp(masked - m)
            denom = jnp.sum(e, axis=-1, keepdims=True)
            # Deferred normalization: O(S*d_head) multiply + EUP reciprocal instead of an
            # O(S^2) divide of the probability matrix; probs cast to bf16 for the AV matmul.
            z_h = jnp.dot(e.astype(jnp.bfloat16), v_h,
                          preferred_element_type=jnp.float32)              # (S, d_head)
            z_heads.append(z_h * pl.reciprocal(denom, approx=True))
        z_rows.append(jnp.concatenate(z_heads, axis=-1))                   # (S, H*d_head)
    z_all = jnp.concatenate(z_rows, axis=0)                                # (B_blk*S, H*d_head)

    # ---- fused output projection: single (H*d_head x D) matmul ----
    attn_out = jnp.dot(z_all.astype(jnp.bfloat16), wo_ref[...],
                       preferred_element_type=jnp.float32)                 # (B_blk*S, D)
    resid_mid = x2 + attn_out                                              # f32 residual add

    # ---- feed-forward MLP (bf16 operands, f32 accumulation / bias / residual) ----
    # TODO(synk): at real d_model/d_mlp, stream d_mlp slabs via an "arbitrary" grid axis
    # instead of keeping both MLP weights fully VMEM-resident (required on v7x's 64 MiB).
    pre = jnp.dot(resid_mid.astype(jnp.bfloat16), w_in_ref[...],
                  preferred_element_type=jnp.float32) + b_in_ref[...]      # (B_blk*S, d_mlp)
    if act_type == "ReLU":
        post = jnp.maximum(pre, 0.0)
    elif act_type == "GeLU":
        post = jax.nn.gelu(pre, approximate=False)
    else:
        raise ValueError(f"unsupported act_type {act_type}")
    mlp_out = jnp.dot(post.astype(jnp.bfloat16), w_out_ref[...],
                      preferred_element_type=jnp.float32) + b_out_ref[...]  # (B_blk*S, D)

    # TODO(synk): use_ln=True path (nn.LayerNorm after each residual) not implemented;
    # the module default is use_ln=False, which is what this kernel computes.
    out = resid_mid + mlp_out
    o_ref[...] = out.reshape(B_blk, S, D).astype(o_ref.dtype)


def transformer_block(x, w_q, w_k, w_v, w_o, w_in, b_in, w_out, b_out, *,
                      act_type="ReLU", batch_block=None):
    """x: (B, S, D); weights in the PyTorch module's layouts. Returns (B, S, D)."""
    B, S, D = x.shape
    H, d_head, D2 = w_q.shape
    assert D2 == D
    d_mlp = w_in.shape[0]

    # Pack multiple batch rows per grid step so matmul LHS fills MXU sublane rows
    # (with S=8, a single batch row uses only 8/128 sublanes).
    if batch_block is None:
        batch_block = max(1, min(B, 128 // max(S, 1)))
        while B % batch_block != 0:
            batch_block -= 1
    assert B % batch_block == 0

    def head_major(w):  # (H, d_head, D) -> (D, H*d_head), '(i h)' column order
        return jnp.transpose(w, (2, 0, 1)).reshape(D, H * d_head)

    # Weight re-layout + bf16 cast, done once in the wrapper (outside the kernel):
    scale = 1.0 / math.sqrt(d_head)
    wqkv = jnp.concatenate(
        [head_major(w_q) * scale, head_major(w_k), head_major(w_v)],
        axis=1).astype(jnp.bfloat16)                              # (D, 3*H*d_head)
    wo_t = w_o.T.astype(jnp.bfloat16)                             # (H*d_head, D), '(i h)' rows
    w_in_t = w_in.T.astype(jnp.bfloat16)                          # (D, d_mlp)
    w_out_t = w_out.T.astype(jnp.bfloat16)                        # (d_mlp, D)
    b_in2 = b_in.reshape(1, d_mlp).astype(jnp.float32)
    b_out2 = b_out.reshape(1, D).astype(jnp.float32)

    kernel = functools.partial(transformer_block_kernel, act_type=act_type,
                               num_heads=H, d_head=d_head)

    def resident(a):
        # Whole-array block, constant index_map -> DMA'd into VMEM once, reused every step.
        return pl.BlockSpec(a.shape, lambda b: (0,) * a.ndim)

    return pl.pallas_call(
        kernel,
        out_shape=jax.ShapeDtypeStruct((B, S, D), x.dtype),
        grid_spec=pltpu.PrefetchScalarGridSpec(
            num_scalar_prefetch=0,
            grid=(B // batch_block,),
            in_specs=[
                pl.BlockSpec((batch_block, S, D), lambda b: (b, 0, 0)),   # x tile
                resident(wqkv), resident(wo_t),
                resident(w_in_t), resident(b_in2),
                resident(w_out_t), resident(b_out2),
            ],
            out_specs=pl.BlockSpec((batch_block, S, D), lambda b: (b, 0, 0)),
        ),
        compiler_params=pltpu.CompilerParams(
            dimension_semantics=("parallel",),
            # Plenty for these shapes (bf16 weights < 1 MiB). Raise on v5e/v6e (128 MiB
            # physical) for larger d_model/d_mlp; plan d_mlp tiling around 64 MiB on v7x.
            vmem_limit_bytes=32 * 1024 * 1024,
        ),
    )(x, wqkv, wo_t, w_in_t, b_in2, w_out_t, b_out2)


if __name__ == "__main__":
    # Small shapes consistent with the module; D chosen lane-dense (multiple of 128).
    B, S = 2, 8
    d_model, num_heads, d_head, d_mlp, n_ctx = 128, 4, 32, 512, 16
    act_type = "ReLU"

    key = jax.random.PRNGKey(0)
    kx, kq, kkey, kv, ko, ki, kw = jax.random.split(key, 7)

    scale = 1.0 / math.sqrt(d_model)
    x = jax.random.normal(kx, (B, S, d_model), dtype=jnp.float32)
    w_q = jax.random.normal(kq, (num_heads, d_head, d_model), jnp.float32) * scale
    w_k = jax.random.normal(kkey, (num_heads, d_head, d_model), jnp.float32) * scale
    w_v = jax.random.normal(kv, (num_heads, d_head, d_model), jnp.float32) * scale
    w_o = jax.random.normal(ko, (d_model, d_head * num_heads), jnp.float32) * scale
    w_in = jax.random.normal(ki, (d_mlp, d_model), jnp.float32) * scale
    b_in = jnp.zeros((d_mlp,), jnp.float32)
    w_out = jax.random.normal(kw, (d_model, d_mlp), jnp.float32) * scale
    b_out = jnp.zeros((d_model,), jnp.float32)

    out = transformer_block(x, w_q, w_k, w_v, w_o, w_in, b_in, w_out, b_out,
                            act_type=act_type)
    out = jax.block_until_ready(out)

    # ---- pure-JAX reference mirroring the PyTorch forward (use_ln=False) ----
    k = jnp.einsum('ihd,bpd->biph', w_k, x)
    q = jnp.einsum('ihd,bpd->biph', w_q, x)
    v = jnp.einsum('ihd,bpd->biph', w_v, x)
    scores = jnp.einsum('biph,biqh->biqp', k, q)
    mask = jnp.tril(jnp.ones((n_ctx, n_ctx), jnp.float32))[:S, :S]
    masked = jnp.tril(scores) - 1e10 * (1.0 - mask)
    attn = jax.nn.softmax(masked / math.sqrt(d_head), axis=-1)
    z = jnp.einsum('biph,biqp->biqh', v, attn)
    z_flat = jnp.transpose(z, (0, 2, 1, 3)).reshape(B, S, num_heads * d_head)
    attn_out_ref = jnp.einsum('df,bqf->bqd', w_o, z_flat)
    resid_mid = x + attn_out_ref
    pre = jnp.einsum('md,bpd->bpm', w_in, resid_mid) + b_in
    post = jnp.maximum(pre, 0.0)
    mlp_out = jnp.einsum('dm,bpm->bpd', w_out, post) + b_out
    ref = resid_mid + mlp_out

    assert out.shape == (B, S, d_model)
    assert out.dtype == x.dtype
    # Tolerance covers bf16 matmul operands (f32 accumulation / residuals / softmax stats).
    err = float(jnp.max(jnp.abs(out - ref)))
    assert jnp.allclose(out, ref, atol=3e-2, rtol=3e-2), f"max abs err {err}"

    print("KERNEL_OK")
</pallas_src>

<mosaic_0001>
module attributes {stable_mosaic.version = 11 : i64} {
  func.func @transformer_block_kernel(%arg0: i32, %arg1: memref<2x8x128xf32, #tpu.memory_space<vmem>>, %arg2: memref<128x384xbf16, #tpu.memory_space<vmem>>, %arg3: memref<128x128xbf16, #tpu.memory_space<vmem>>, %arg4: memref<128x512xbf16, #tpu.memory_space<vmem>>, %arg5: memref<1x512xf32, #tpu.memory_space<vmem>>, %arg6: memref<512x128xbf16, #tpu.memory_space<vmem>>, %arg7: memref<1x128xf32, #tpu.memory_space<vmem>>, %arg8: memref<2x8x128xf32, #tpu.memory_space<vmem>>) attributes {dimension_semantics = [#tpu.dimension_semantics<parallel>], iteration_bounds = array<i64: 1>, scalar_prefetch = 0 : i64, scratch_operands = 0 : i64, tpu.core_type = #tpu.core_type<tc>, window_params = [{transform_indices = @transform_0, window_bounds = array<i64: 2, 8, 128>}, {pipeline_mode = #tpu.pipeline_mode<synchronous>, transform_indices = @transform_1, window_bounds = array<i64: 128, 384>}, {pipeline_mode = #tpu.pipeline_mode<synchronous>, transform_indices = @transform_2, window_bounds = array<i64: 128, 128>}, {pipeline_mode = #tpu.pipeline_mode<synchronous>, transform_indices = @transform_3, window_bounds = array<i64: 128, 512>}, {pipeline_mode = #tpu.pipeline_mode<synchronous>, transform_indices = @transform_4, window_bounds = array<i64: 1, 512>}, {pipeline_mode = #tpu.pipeline_mode<synchronous>, transform_indices = @transform_5, window_bounds = array<i64: 512, 128>}, {pipeline_mode = #tpu.pipeline_mode<synchronous>, transform_indices = @transform_6, window_bounds = array<i64: 1, 128>}, {transform_indices = @transform_7, window_bounds = array<i64: 2, 8, 128>}]} {
    %c0 = arith.constant 0 : index
    %c0_0 = arith.constant 0 : index
    %c0_1 = arith.constant 0 : index
    %0 = vector.load %arg1[%c0, %c0_0, %c0_1] : memref<2x8x128xf32, #tpu.memory_space<vmem>>, vector<2x8x128xf32>
    %1 = vector.shape_cast %0 : vector<2x8x128xf32> to vector<16x128xf32>
    %2 = arith.truncf %1 : vector<16x128xf32> to vector<16x128xbf16>
    %c0_2 = arith.constant 0 : index
    %c0_3 = arith.constant 0 : index
    %3 = vector.load %arg2[%c0_2, %c0_3] : memref<128x384xbf16, #tpu.memory_space<vmem>>, vector<128x384xbf16>
    %cst = arith.constant dense<0.000000e+00> : vector<16x384xf32>
    %4 = tpu.matmul %2, %3, %cst {dimension_numbers = #tpu.dot_dimension_numbers<[1], [0], [0], [1], [0, 0, 1, 1], [], []>} : vector<16x128xbf16>, vector<128x384xbf16>, vector<16x384xf32> -> vector<16x384xf32>
    %5 = arith.truncf %4 : vector<16x384xf32> to vector<16x384xbf16>
    %6 = tpu.iota {dimensions = array<i32: 0>} : vector<8x8xi32>
    %7 = tpu.iota {dimensions = array<i32: 1>} : vector<8x8xi32>
    %8 = arith.cmpi sle, %7, %6 : vector<8x8xi32>
    %9 = vector.extract_strided_slice %5 {offsets = [0, 0], sizes = [8, 128], strides = [1, 1]} : vector<16x384xbf16> to vector<8x128xbf16>
    %10 = vector.extract_strided_slice %5 {offsets = [0, 128], sizes = [8, 128], strides = [1, 1]} : vector<16x384xbf16> to vector<8x128xbf16>
    %11 = vector.extract_strided_slice %5 {offsets = [0, 256], sizes = [8, 128], strides = [1, 1]} : vector<16x384xbf16> to vector<8x128xbf16>
    %12 = vector.extract_strided_slice %9 {offsets = [0, 0], sizes = [8, 32], strides = [1, 1]} : vector<8x128xbf16> to vector<8x32xbf16>
    %13 = vector.extract_strided_slice %10 {offsets = [0, 0], sizes = [8, 32], strides = [1, 1]} : vector<8x128xbf16> to vector<8x32xbf16>
    %14 = vector.extract_strided_slice %11 {offsets = [0, 0], sizes = [8, 32], strides = [1, 1]} : vector<8x128xbf16> to vector<8x32xbf16>
    %cst_4 = arith.constant dense<0.000000e+00> : vector<8x8xf32>
    %15 = tpu.matmul %12, %13, %cst_4 {dimension_numbers = #tpu.dot_dimension_numbers<[1], [1], [0], [0], [0, 0, 1, 0], [], []>} : vector<8x32xbf16>, vector<8x32xbf16>, vector<8x8xf32> -> vector<8x8xf32>
    %cst_5 = arith.constant -1.000000e+10 : f32
    %16 = vector.broadcast %cst_5 : f32 to vector<8x8xf32>
    %17 = arith.select %8, %15, %16 : vector<8x8xi1>, vector<8x8xf32>
    %cst_6 = arith.constant dense<0xFF800000> : vector<8xf32>
    %18 = vector.multi_reduction <maximumf>, %17, %cst_6 [1] : vector<8x8xf32> to vector<8xf32>
    %19 = vector.shape_cast %18 : vector<8xf32> to vector<8x1xf32>
    %20 = vector.broadcast %19 : vector<8x1xf32> to vector<8x8xf32>
    %21 = arith.subf %17, %20 : vector<8x8xf32>
    %22 = math.exp %21 : vector<8x8xf32>
    %cst_7 = arith.constant dense<0.000000e+00> : vector<8xf32>
    %23 = vector.multi_reduction <add>, %22, %cst_7 [1] : vector<8x8xf32> to vector<8xf32>
    %24 = vector.shape_cast %23 : vector<8xf32> to vector<8x1xf32>
    %25 = arith.truncf %22 : vector<8x8xf32> to vector<8x8xbf16>
    %cst_8 = arith.constant dense<0.000000e+00> : vector<8x32xf32>
    %26 = tpu.matmul %25, %14, %cst_8 {dimension_numbers = #tpu.dot_dimension_numbers<[1], [0], [0], [1], [0, 0, 1, 1], [], []>} : vector<8x8xbf16>, vector<8x32xbf16>, vector<8x32xf32> -> vector<8x32xf32>
    %27 = tpu.reciprocal %24 {approx = true} : vector<8x1xf32> -> vector<8x1xf32>
    %28 = vector.broadcast %27 : vector<8x1xf32> to vector<8x32xf32>
    %29 = arith.mulf %26, %28 : vector<8x32xf32>
    %30 = vector.extract_strided_slice %9 {offsets = [0, 32], sizes = [8, 32], strides = [1, 1]} : vector<8x128xbf16> to vector<8x32xbf16>
    %31 = vector.extract_strided_slice %10 {offsets = [0, 32], sizes = [8, 32], strides = [1, 1]} : vector<8x128xbf16> to vector<8x32xbf16>
    %32 = vector.extract_strided_slice %11 {offsets = [0, 32], sizes = [8, 32], strides = [1, 1]} : vector<8x128xbf16> to vector<8x32xbf16>
    %cst_9 = arith.constant dense<0.000000e+00> : vector<8x8xf32>
    %33 = tpu.matmul %30, %31, %cst_9 {dimension_numbers = #tpu.dot_dimension_numbers<[1], [1], [0], [0], [0, 0, 1, 0], [], []>} : vector<8x32xbf16>, vector<8x32xbf16>, vector<8x8xf32> -> vector<8x8xf32>
    %cst_10 = arith.constant -1.000000e+10 : f32
    %34 = vector.broadcast %cst_10 : f32 to vector<8x8xf32>
    %35 = arith.select %8, %33, %34 : vector<8x8xi1>, vector<8x8xf32>
    %cst_11 = arith.constant dense<0xFF800000> : vector<8xf32>
    %36 = vector.multi_reduction <maximumf>, %35, %cst_11 [1] : vector<8x8xf32> to vector<8xf32>
    %37 = vector.shape_cast %36 : vector<8xf32> to vector<8x1xf32>
    %38 = vector.broadcast %37 : vector<8x1xf32> to vector<8x8xf32>
    %39 = arith.subf %35, %38 : vector<8x8xf32>
    %40 = math.exp %39 : vector<8x8xf32>
    %cst_12 = arith.constant dense<0.000000e+00> : vector<8xf32>
    %41 = vector.multi_reduction <add>, %40, %cst_12 [1] : vector<8x8xf32> to vector<8xf32>
    %42 = vector.shape_cast %41 : vector<8xf32> to vector<8x1xf32>
    %43 = arith.truncf %40 : vector<8x8xf32> to vector<8x8xbf16>
    %cst_13 = arith.constant dense<0.000000e+00> : vector<8x32xf32>
    %44 = tpu.matmul %43, %32, %cst_13 {dimension_numbers = #tpu.dot_dimension_numbers<[1], [0], [0], [1], [0, 0, 1, 1], [], []>} : vector<8x8xbf16>, vector<8x32xbf16>, vector<8x32xf32> -> vector<8x32xf32>
    %45 = tpu.reciprocal %42 {approx = true} : vector<8x1xf32> -> vector<8x1xf32>
    %46 = vector.broadcast %45 : vector<8x1xf32> to vector<8x32xf32>
    %47 = arith.mulf %44, %46 : vector<8x32xf32>
    %48 = vector.extract_strided_slice %9 {offsets = [0, 64], sizes = [8, 32], strides = [1, 1]} : vector<8x128xbf16> to vector<8x32xbf16>
    %49 = vector.extract_strided_slice %10 {offsets = [0, 64], sizes = [8, 32], strides = [1, 1]} : vector<8x128xbf16> to vector<8x32xbf16>
    %50 = vector.extract_strided_slice %11 {offsets = [0, 64], sizes = [8, 32], strides = [1, 1]} : vector<8x128xbf16> to vector<8x32xbf16>
    %cst_14 = arith.constant dense<0.000000e+00> : vector<8x8xf32>
    %51 = tpu.matmul %48, %49, %cst_14 {dimension_numbers = #tpu.dot_dimension_numbers<[1], [1], [0], [0], [0, 0, 1, 0], [], []>} : vector<8x32xbf16>, vector<8x32xbf16>, vector<8x8xf32> -> vector<8x8xf32>
    %cst_15 = arith.constant -1.000000e+10 : f32
    %52 = vector.broadcast %cst_15 : f32 to vector<8x8xf32>
    %53 = arith.select %8, %51, %52 : vector<8x8xi1>, vector<8x8xf32>
    %cst_16 = arith.constant dense<0xFF800000> : vector<8xf32>
    %54 = vector.multi_reduction <maximumf>, %53, %cst_16 [1] : vector<8x8xf32> to vector<8xf32>
    %55 = vector.shape_cast %54 : vector<8xf32> to vector<8x1xf32>
    %56 = vector.broadcast %55 : vector<8x1xf32> to vector<8x8xf32>
    %57 = arith.subf %53, %56 : vector<8x8xf32>
    %58 = math.exp %57 : vector<8x8xf32>
    %cst_17 = arith.constant dense<0.000000e+00> : vector<8xf32>
    %59 = vector.multi_reduction <add>, %58, %cst_17 [1] : vector<8x8xf32> to vector<8xf32>
    %60 = vector.shape_cast %59 : vector<8xf32> to vector<8x1xf32>
    %61 = arith.truncf %58 : vector<8x8xf32> to vector<8x8xbf16>
    %cst_18 = arith.constant dense<0.000000e+00> : vector<8x32xf32>
    %62 = tpu.matmul %61, %50, %cst_18 {dimension_numbers = #tpu.dot_dimension_numbers<[1], [0], [0], [1], [0, 0, 1, 1], [], []>} : vector<8x8xbf16>, vector<8x32xbf16>, vector<8x32xf32> -> vector<8x32xf32>
    %63 = tpu.reciprocal %60 {approx = true} : vector<8x1xf32> -> vector<8x1xf32>
    %64 = vector.broadcast %63 : vector<8x1xf32> to vector<8x32xf32>
    %65 = arith.mulf %62, %64 : vector<8x32xf32>
    %66 = vector.extract_strided_slice %9 {offsets = [0, 96], sizes = [8, 32], strides = [1, 1]} : vector<8x128xbf16> to vector<8x32xbf16>
    %67 = vector.extract_strided_slice %10 {offsets = [0, 96], sizes = [8, 32], strides = [1, 1]} : vector<8x128xbf16> to vector<8x32xbf16>
    %68 = vector.extract_strided_slice %11 {offsets = [0, 96], sizes = [8, 32], strides = [1, 1]} : vector<8x128xbf16> to vector<8x32xbf16>
    %cst_19 = arith.constant dense<0.000000e+00> : vector<8x8xf32>
    %69 = tpu.matmul %66, %67, %cst_19 {dimension_numbers = #tpu.dot_dimension_numbers<[1], [1], [0], [0], [0, 0, 1, 0], [], []>} : vector<8x32xbf16>, vector<8x32xbf16>, vector<8x8xf32> -> vector<8x8xf32>
    %cst_20 = arith.constant -1.000000e+10 : f32
    %70 = vector.broadcast %cst_20 : f32 to vector<8x8xf32>
    %71 = arith.select %8, %69, %70 : vector<8x8xi1>, vector<8x8xf32>
    %cst_21 = arith.constant dense<0xFF800000> : vector<8xf32>
    %72 = vector.multi_reduction <maximumf>, %71, %cst_21 [1] : vector<8x8xf32> to vector<8xf32>
    %73 = vector.shape_cast %72 : vector<8xf32> to vector<8x1xf32>
    %74 = vector.broadcast %73 : vector<8x1xf32> to vector<8x8xf32>
    %75 = arith.subf %71, %74 : vector<8x8xf32>
    %76 = math.exp %75 : vector<8x8xf32>
    %cst_22 = arith.constant dense<0.000000e+00> : vector<8xf32>
    %77 = vector.multi_reduction <add>, %76, %cst_22 [1] : vector<8x8xf32> to vector<8xf32>
    %78 = vector.shape_cast %77 : vector<8xf32> to vector<8x1xf32>
    %79 = arith.truncf %76 : vector<8x8xf32> to vector<8x8xbf16>
    %cst_23 = arith.constant dense<0.000000e+00> : vector<8x32xf32>
    %80 = tpu.matmul %79, %68, %cst_23 {dimension_numbers = #tpu.dot_dimension_numbers<[1], [0], [0], [1], [0, 0, 1, 1], [], []>} : vector<8x8xbf16>, vector<8x32xbf16>, vector<8x32xf32> -> vector<8x32xf32>
    %81 = tpu.reciprocal %78 {approx = true} : vector<8x1xf32> -> vector<8x1xf32>
    %82 = vector.broadcast %81 : vector<8x1xf32> to vector<8x32xf32>
    %83 = arith.mulf %80, %82 : vector<8x32xf32>
    %84 = tpu.concatenate %29, %47, %65, %83 in 1 : vector<8x32xf32>, vector<8x32xf32>, vector<8x32xf32>, vector<8x32xf32> -> vector<8x128xf32>
    %85 = vector.extract_strided_slice %5 {offsets = [8, 0], sizes = [8, 128], strides = [1, 1]} : vector<16x384xbf16> to vector<8x128xbf16>
    %86 = vector.extract_strided_slice %5 {offsets = [8, 128], sizes = [8, 128], strides = [1, 1]} : vector<16x384xbf16> to vector<8x128xbf16>
    %87 = vector.extract_strided_slice %5 {offsets = [8, 256], sizes = [8, 128], strides = [1, 1]} : vector<16x384xbf16> to vector<8x128xbf16>
    %88 = vector.extract_strided_slice %85 {offsets = [0, 0], sizes = [8, 32], strides = [1, 1]} : vector<8x128xbf16> to vector<8x32xbf16>
    %89 = vector.extract_strided_slice %86 {offsets = [0, 0], sizes = [8, 32], strides = [1, 1]} : vector<8x128xbf16> to vector<8x32xbf16>
    %90 = vector.extract_strided_slice %87 {offsets = [0, 0], sizes = [8, 32], strides = [1, 1]} : vector<8x128xbf16> to vector<8x32xbf16>
    %cst_24 = arith.constant dense<0.000000e+00> : vector<8x8xf32>
    %91 = tpu.matmul %88, %89, %cst_24 {dimension_numbers = #tpu.dot_dimension_numbers<[1], [1], [0], [0], [0, 0, 1, 0], [], []>} : vector<8x32xbf16>, vector<8x32xbf16>, vector<8x8xf32> -> vector<8x8xf32>
    %cst_25 = arith.constant -1.000000e+10 : f32
    %92 = vector.broadcast %cst_25 : f32 to vector<8x8xf32>
    %93 = arith.select %8, %91, %92 : vector<8x8xi1>, vector<8x8xf32>
    %cst_26 = arith.constant dense<0xFF800000> : vector<8xf32>
    %94 = vector.multi_reduction <maximumf>, %93, %cst_26 [1] : vector<8x8xf32> to vector<8xf32>
    %95 = vector.shape_cast %94 : vector<8xf32> to vector<8x1xf32>
    %96 = vector.broadcast %95 : vector<8x1xf32> to vector<8x8xf32>
    %97 = arith.subf %93, %96 : vector<8x8xf32>
    %98 = math.exp %97 : vector<8x8xf32>
    %cst_27 = arith.constant dense<0.000000e+00> : vector<8xf32>
    %99 = vector.multi_reduction <add>, %98, %cst_27 [1] : vector<8x8xf32> to vector<8xf32>
    %100 = vector.shape_cast %99 : vector<8xf32> to vector<8x1xf32>
    %101 = arith.truncf %98 : vector<8x8xf32> to vector<8x8xbf16>
    %cst_28 = arith.constant dense<0.000000e+00> : vector<8x32xf32>
    %102 = tpu.matmul %101, %90, %cst_28 {dimension_numbers = #tpu.dot_dimension_numbers<[1], [0], [0], [1], [0, 0, 1, 1], [], []>} : vector<8x8xbf16>, vector<8x32xbf16>, vector<8x32xf32> -> vector<8x32xf32>
    %103 = tpu.reciprocal %100 {approx = true} : vector<8x1xf32> -> vector<8x1xf32>
    %104 = vector.broadcast %103 : vector<8x1xf32> to vector<8x32xf32>
    %105 = arith.mulf %102, %104 : vector<8x32xf32>
    %106 = vector.extract_strided_slice %85 {offsets = [0, 32], sizes = [8, 32], strides = [1, 1]} : vector<8x128xbf16> to vector<8x32xbf16>
    %107 = vector.extract_strided_slice %86 {offsets = [0, 32], sizes = [8, 32], strides = [1, 1]} : vector<8x128xbf16> to vector<8x32xbf16>
    %108 = vector.extract_strided_slice %87 {offsets = [0, 32], sizes = [8, 32], strides = [1, 1]} : vector<8x128xbf16> to vector<8x32xbf16>
    %cst_29 = arith.constant dense<0.000000e+00> : vector<8x8xf32>
    %109 = tpu.matmul %106, %107, %cst_29 {dimension_numbers = #tpu.dot_dimension_numbers<[1], [1], [0], [0], [0, 0, 1, 0], [], []>} : vector<8x32xbf16>, vector<8x32xbf16>, vector<8x8xf32> -> vector<8x8xf32>
    %cst_30 = arith.constant -1.000000e+10 : f32
    %110 = vector.broadcast %cst_30 : f32 to vector<8x8xf32>
    %111 = arith.select %8, %109, %110 : vector<8x8xi1>, vector<8x8xf32>
    %cst_31 = arith.constant dense<0xFF800000> : vector<8xf32>
    %112 = vector.multi_reduction <maximumf>, %111, %cst_31 [1] : vector<8x8xf32> to vector<8xf32>
    %113 = vector.shape_cast %112 : vector<8xf32> to vector<8x1xf32>
    %114 = vector.broadcast %113 : vector<8x1xf32> to vector<8x8xf32>
    %115 = arith.subf %111, %114 : vector<8x8xf32>
    %116 = math.exp %115 : vector<8x8xf32>
    %cst_32 = arith.constant dense<0.000000e+00> : vector<8xf32>
    %117 = vector.multi_reduction <add>, %116, %cst_32 [1] : vector<8x8xf32> to vector<8xf32>
    %118 = vector.shape_cast %117 : vector<8xf32> to vector<8x1xf32>
    %119 = arith.truncf %116 : vector<8x8xf32> to vector<8x8xbf16>
    %cst_33 = arith.constant dense<0.000000e+00> : vector<8x32xf32>
    %120 = tpu.matmul %119, %108, %cst_33 {dimension_numbers = #tpu.dot_dimension_numbers<[1], [0], [0], [1], [0, 0, 1, 1], [], []>} : vector<8x8xbf16>, vector<8x32xbf16>, vector<8x32xf32> -> vector<8x32xf32>
    %121 = tpu.reciprocal %118 {approx = true} : vector<8x1xf32> -> vector<8x1xf32>
    %122 = vector.broadcast %121 : vector<8x1xf32> to vector<8x32xf32>
    %123 = arith.mulf %120, %122 : vector<8x32xf32>
    %124 = vector.extract_strided_slice %85 {offsets = [0, 64], sizes = [8, 32], strides = [1, 1]} : vector<8x128xbf16> to vector<8x32xbf16>
    %125 = vector.extract_strided_slice %86 {offsets = [0, 64], sizes = [8, 32], strides = [1, 1]} : vector<8x128xbf16> to vector<8x32xbf16>
    %126 = vector.extract_strided_slice %87 {offsets = [0, 64], sizes = [8, 32], strides = [1, 1]} : vector<8x128xbf16> to vector<8x32xbf16>
    %cst_34 = arith.constant dense<0.000000e+00> : vector<8x8xf32>
    %127 = tpu.matmul %124, %125, %cst_34 {dimension_numbers = #tpu.dot_dimension_numbers<[1], [1], [0], [0], [0, 0, 1, 0], [], []>} : vector<8x32xbf16>, vector<8x32xbf16>, vector<8x8xf32> -> vector<8x8xf32>
    %cst_35 = arith.constant -1.000000e+10 : f32
    %128 = vector.broadcast %cst_35 : f32 to vector<8x8xf32>
    %129 = arith.select %8, %127, %128 : vector<8x8xi1>, vector<8x8xf32>
    %cst_36 = arith.constant dense<0xFF800000> : vector<8xf32>
    %130 = vector.multi_reduction <maximumf>, %129, %cst_36 [1] : vector<8x8xf32> to vector<8xf32>
    %131 = vector.shape_cast %130 : vector<8xf32> to vector<8x1xf32>
    %132 = vector.broadcast %131 : vector<8x1xf32> to vector<8x8xf32>
    %133 = arith.subf %129, %132 : vector<8x8xf32>
    %134 = math.exp %133 : vector<8x8xf32>
    %cst_37 = arith.constant dense<0.000000e+00> : vector<8xf32>
    %135 = vector.multi_reduction <add>, %134, %cst_37 [1] : vector<8x8xf32> to vector<8xf32>
    %136 = vector.shape_cast %135 : vector<8xf32> to vector<8x1xf32>
    %137 = arith.truncf %134 : vector<8x8xf32> to vector<8x8xbf16>
    %cst_38 = arith.constant dense<0.000000e+00> : vector<8x32xf32>
    %138 = tpu.matmul %137, %126, %cst_38 {dimension_numbers = #tpu.dot_dimension_numbers<[1], [0], [0], [1], [0, 0, 1, 1], [], []>} : vector<8x8xbf16>, vector<8x32xbf16>, vector<8x32xf32> -> vector<8x32xf32>
    %139 = tpu.reciprocal %136 {approx = true} : vector<8x1xf32> -> vector<8x1xf32>
    %140 = vector.broadcast %139 : vector<8x1xf32> to vector<8x32xf32>
    %141 = arith.mulf %138, %140 : vector<8x32xf32>
    %142 = vector.extract_strided_slice %85 {offsets = [0, 96], sizes = [8, 32], strides = [1, 1]} : vector<8x128xbf16> to vector<8x32xbf16>
    %143 = vector.extract_strided_slice %86 {offsets = [0, 96], sizes = [8, 32], strides = [1, 1]} : vector<8x128xbf16> to vector<8x32xbf16>
    %144 = vector.extract_strided_slice %87 {offsets = [0, 96], sizes = [8, 32], strides = [1, 1]} : vector<8x128xbf16> to vector<8x32xbf16>
    %cst_39 = arith.constant dense<0.000000e+00> : vector<8x8xf32>
    %145 = tpu.matmul %142, %143, %cst_39 {dimension_numbers = #tpu.dot_dimension_numbers<[1], [1], [0], [0], [0, 0, 1, 0], [], []>} : vector<8x32xbf16>, vector<8x32xbf16>, vector<8x8xf32> -> vector<8x8xf32>
    %cst_40 = arith.constant -1.000000e+10 : f32
    %146 = vector.broadcast %cst_40 : f32 to vector<8x8xf32>
    %147 = arith.select %8, %145, %146 : vector<8x8xi1>, vector<8x8xf32>
    %cst_41 = arith.constant dense<0xFF800000> : vector<8xf32>
    %148 = vector.multi_reduction <maximumf>, %147, %cst_41 [1] : vector<8x8xf32> to vector<8xf32>
    %149 = vector.shape_cast %148 : vector<8xf32> to vector<8x1xf32>
    %150 = vector.broadcast %149 : vector<8x1xf32> to vector<8x8xf32>
    %151 = arith.subf %147, %150 : vector<8x8xf32>
    %152 = math.exp %151 : vector<8x8xf32>
    %cst_42 = arith.constant dense<0.000000e+00> : vector<8xf32>
    %153 = vector.multi_reduction <add>, %152, %cst_42 [1] : vector<8x8xf32> to vector<8xf32>
    %154 = vector.shape_cast %153 : vector<8xf32> to vector<8x1xf32>
    %155 = arith.truncf %152 : vector<8x8xf32> to vector<8x8xbf16>
    %cst_43 = arith.constant dense<0.000000e+00> : vector<8x32xf32>
    %156 = tpu.matmul %155, %144, %cst_43 {dimension_numbers = #tpu.dot_dimension_numbers<[1], [0], [0], [1], [0, 0, 1, 1], [], []>} : vector<8x8xbf16>, vector<8x32xbf16>, vector<8x32xf32> -> vector<8x32xf32>
    %157 = tpu.reciprocal %154 {approx = true} : vector<8x1xf32> -> vector<8x1xf32>
    %158 = vector.broadcast %157 : vector<8x1xf32> to vector<8x32xf32>
    %159 = arith.mulf %156, %158 : vector<8x32xf32>
    %160 = tpu.concatenate %105, %123, %141, %159 in 1 : vector<8x32xf32>, vector<8x32xf32>, vector<8x32xf32>, vector<8x32xf32> -> vector<8x128xf32>
    %161 = tpu.concatenate %84, %160 in 0 : vector<8x128xf32>, vector<8x128xf32> -> vector<16x128xf32>
    %162 = arith.truncf %161 : vector<16x128xf32> to vector<16x128xbf16>
    %c0_44 = arith.constant 0 : index
    %c0_45 = arith.constant 0 : index
    %163 = vector.load %arg3[%c0_44, %c0_45] : memref<128x128xbf16, #tpu.memory_space<vmem>>, vector<128x128xbf16>
    %cst_46 = arith.constant dense<0.000000e+00> : vector<16x128xf32>
    %164 = tpu.matmul %162, %163, %cst_46 {dimension_numbers = #tpu.dot_dimension_numbers<[1], [0], [0], [1], [0, 0, 1, 1], [], []>} : vector<16x128xbf16>, vector<128x128xbf16>, vector<16x128xf32> -> vector<16x128xf32>
    %165 = arith.addf %1, %164 : vector<16x128xf32>
    %166 = arith.truncf %165 : vector<16x128xf32> to vector<16x128xbf16>
    %c0_47 = arith.constant 0 : index
    %c0_48 = arith.constant 0 : index
    %167 = vector.load %arg4[%c0_47, %c0_48] : memref<128x512xbf16, #tpu.memory_space<vmem>>, vector<128x512xbf16>
    %cst_49 = arith.constant dense<0.000000e+00> : vector<16x512xf32>
    %168 = tpu.matmul %166, %167, %cst_49 {dimension_numbers = #tpu.dot_dimension_numbers<[1], [0], [0], [1], [0, 0, 1, 1], [], []>} : vector<16x128xbf16>, vector<128x512xbf16>, vector<16x512xf32> -> vector<16x512xf32>
    %c0_50 = arith.constant 0 : index
    %c0_51 = arith.constant 0 : index
    %169 = vector.load %arg5[%c0_50, %c0_51] : memref<1x512xf32, #tpu.memory_space<vmem>>, vector<1x512xf32>
    %170 = vector.broadcast %169 : vector<1x512xf32> to vector<16x512xf32>
    %171 = arith.addf %168, %170 : vector<16x512xf32>
    %cst_52 = arith.constant 0.000000e+00 : f32
    %172 = vector.broadcast %cst_52 : f32 to vector<16x512xf32>
    %173 = arith.maximumf %171, %172 : vector<16x512xf32>
    %174 = arith.truncf %173 : vector<16x512xf32> to vector<16x512xbf16>
    %c0_53 = arith.constant 0 : index
    %c0_54 = arith.constant 0 : index
    %175 = vector.load %arg6[%c0_53, %c0_54] : memref<512x128xbf16, #tpu.memory_space<vmem>>, vector<512x128xbf16>
    %cst_55 = arith.constant dense<0.000000e+00> : vector<16x128xf32>
    %176 = tpu.matmul %174, %175, %cst_55 {dimension_numbers = #tpu.dot_dimension_numbers<[1], [0], [0], [1], [0, 0, 1, 1], [], []>} : vector<16x512xbf16>, vector<512x128xbf16>, vector<16x128xf32> -> vector<16x128xf32>
    %c0_56 = arith.constant 0 : index
    %c0_57 = arith.constant 0 : index
    %177 = vector.load %arg7[%c0_56, %c0_57] : memref<1x128xf32, #tpu.memory_space<vmem>>, vector<1x128xf32>
    %178 = vector.broadcast %177 : vector<1x128xf32> to vector<16x128xf32>
    %179 = arith.addf %176, %178 : vector<16x128xf32>
    %180 = arith.addf %165, %179 : vector<16x128xf32>
    %181 = vector.shape_cast %180 : vector<16x128xf32> to vector<2x8x128xf32>
    %c0_58 = arith.constant 0 : index
    %c0_59 = arith.constant 0 : index
    %c0_60 = arith.constant 0 : index
    %182 = vector.load %arg8[%c0_58, %c0_59, %c0_60] : memref<2x8x128xf32, #tpu.memory_space<vmem>>, vector<2x8x128xf32>
    tpu.vector_store %arg8[%c0_58, %c0_59, %c0_60], %181 {strides = array<i32>} : memref<2x8x128xf32, #tpu.memory_space<vmem>>, vector<2x8x128xf32>,
    return
  }
  func.func @transform_0(%arg0: i32) -> (i32, i32, i32) {
    %c0_i32 = arith.constant 0 : i32
    %c0_i32_0 = arith.constant 0 : i32
    %c0_i32_1 = arith.constant 0 : i32
    return %arg0, %c0_i32, %c0_i32_0 : i32, i32, i32
  }
  func.func @transform_1(%arg0: i32) -> (i32, i32) {
    %c0_i32 = arith.constant 0 : i32
    %c0_i32_0 = arith.constant 0 : i32
    %c0_i32_1 = arith.constant 0 : i32
    return %c0_i32, %c0_i32_0 : i32, i32
  }
  func.func @transform_2(%arg0: i32) -> (i32, i32) {
    %c0_i32 = arith.constant 0 : i32
    %c0_i32_0 = arith.constant 0 : i32
    %c0_i32_1 = arith.constant 0 : i32
    return %c0_i32, %c0_i32_0 : i32, i32
  }
  func.func @transform_3(%arg0: i32) -> (i32, i32) {
    %c0_i32 = arith.constant 0 : i32
    %c0_i32_0 = arith.constant 0 : i32
    %c0_i32_1 = arith.constant 0 : i32
    return %c0_i32, %c0_i32_0 : i32, i32
  }
  func.func @transform_4(%arg0: i32) -> (i32, i32) {
    %c0_i32 = arith.constant 0 : i32
    %c0_i32_0 = arith.constant 0 : i32
    %c0_i32_1 = arith.constant 0 : i32
    return %c0_i32, %c0_i32_0 : i32, i32
  }
  func.func @transform_5(%arg0: i32) -> (i32, i32) {
    %c0_i32 = arith.constant 0 : i32
    %c0_i32_0 = arith.constant 0 : i32
    %c0_i32_1 = arith.constant 0 : i32
    return %c0_i32, %c0_i32_0 : i32, i32
  }
  func.func @transform_6(%arg0: i32) -> (i32, i32) {
    %c0_i32 = arith.constant 0 : i32
    %c0_i32_0 = arith.constant 0 : i32
    %c0_i32_1 = arith.constant 0 : i32
    return %c0_i32, %c0_i32_0 : i32, i32
  }
  func.func @transform_7(%arg0: i32) -> (i32, i32, i32) {
    %c0_i32 = arith.constant 0 : i32
    %c0_i32_0 = arith.constant 0 : i32
    %c0_i32_1 = arith.constant 0 : i32
    return %arg0, %c0_i32, %c0_i32_0 : i32, i32, i32
  }
}

</mosaic_0001>

<llo_original>
// kernel: tpu_custom_call.1
$region0: #{tpu_custom_call.1}
  #allocation0 [shape = 'u32[]', space=smem, size = 0x4, offset = 0x4, fixed_abs, tag = 'smem constant byte address 0x4 - core index']
  #allocation1 [shape = 'u32[144,128]{1,0:T(1,128)}', space=vmem, size = 0x12000, scoped, tag = 'internal scratch']
  %s0 = inlined_call_operand.hbm [shape: f32[2,8,128], index: 0, kind: input, shape index: {}]
  %s1 = inlined_call_operand.hbm [shape: bf16[128,384], index: 1, kind: input, shape index: {}]
  %s2 = inlined_call_operand.hbm [shape: bf16[128,128], index: 2, kind: input, shape index: {}]
  %s3 = inlined_call_operand.hbm [shape: bf16[128,512], index: 3, kind: input, shape index: {}]
  %s4 = inlined_call_operand.vmem [shape: f32[1,512], index: 4, kind: input, shape index: {}]
  %s5 = inlined_call_operand.hbm [shape: bf16[512,128], index: 5, kind: input, shape index: {}]
  %s6 = inlined_call_operand.vmem [shape: f32[1,128], index: 6, kind: input, shape index: {}]
  %s7 = inlined_call_operand.hbm [shape: f32[2,8,128], index: 7, kind: output, shape index: {}]
  %s8 = sld [smem:[#allocation0]]
  $region58: #{tpu_custom_call.1} parent=0
    _
  %s10 = ssub.s32 1, %s8
  %s11 = scalar_select 0, %s10, %s8
  $region1: #{tpu_custom_call.1} parent=0
    #allocation2 [shape = 'u8[8192]{0}', space=vmem, size = 0x2000, scoped, tag = 'input window, operand 0, single buffered']
    #allocation3 [shape = 's32[1]{0}', space=sflag, size = 0x4, scoped, tag = 'scoped memory for tpu_custom_call.1']
    #allocation4 [shape = 's32[1]{0}', space=sflag, size = 0x4, scoped, tag = 'scoped memory for tpu_custom_call.1']
    #allocation5 [shape = 'u8[98304]{0}', space=vmem, size = 0x18000, scoped, tag = 'input window, operand 1, single buffered']
    #allocation6 [shape = 's32[1]{0}', space=sflag, size = 0x4, scoped, tag = 'scoped memory for tpu_custom_call.1']
    #allocation7 [shape = 'u8[32768]{0}', space=vmem, size = 0x8000, scoped, tag = 'input window, operand 2, single buffered']
    #allocation8 [shape = 'u8[131072]{0}', space=vmem, size = 0x20000, scoped, tag = 'input window, operand 3, single buffered']
    #allocation9 [shape = 's32[1]{0}', space=sflag, size = 0x4, scoped, tag = 'scoped memory for tpu_custom_call.1']
    #allocation10 [shape = 'u8[131072]{0}', space=vmem, size = 0x20000, scoped, tag = 'input window, operand 5, single buffered']
    #allocation11 [shape = 'u8[8192]{0}', space=vmem, size = 0x2000, scoped, tag = 'output window, operand 0, single buffered']
    %12 = vsyncpa [#allocation3], 0
    %13 = vsyncpa [#allocation6], 0
    %14 = vsyncpa [#allocation9], 0
    %15 = vsyncpa [#allocation4], 0
    // Predicated region
    $region2: #{tpu_custom_call.1} parent=1 // pred_check
      _
    $region3: #{tpu_custom_call.1} parent=1 // pred_check_branch
      %17 = sbr.rel (0) target = $region5
    $region4: #{tpu_custom_call.1} parent=1 // pred_region
      %s19 = ssub.s32 256, 256
      %20 = vsyncadd [#allocation3], %s19
      %s21 = sshll.u32 [#allocation2], 4
      %s22 = int_to_ptr.vmem [resolvable:$true] %s21
      %27 = dma.hbm_to_vmem [thread:$0]  %s0, 256, %s22, [#allocation3], 128, 128, 8
    $region5: #{tpu_custom_call.1} parent=1 // pred_fallthru
      _
    // Predicated region
    $region6: #{tpu_custom_call.1} parent=1 // pred_check
      _
    $region7: #{tpu_custom_call.1} parent=1 // pred_check_branch
      %29 = sbr.rel (0) target = $region9
    $region8: #{tpu_custom_call.1} parent=1 // pred_region
      %s31 = ssub.s32 3072, 3072
      %32 = vsyncadd [#allocation6], %s31
      %s33 = sshll.u32 [#allocation5], 4
      %s34 = int_to_ptr.vmem [resolvable:$true] %s33
      %39 = dma.hbm_to_vmem [thread:$0]  %s1, 3072, %s34, [#allocation6], 192, 192, 12
    $region9: #{tpu_custom_call.1} parent=1 // pred_fallthru
      _
    // Predicated region
    $region10: #{tpu_custom_call.1} parent=1 // pred_check
      _
    $region11: #{tpu_custom_call.1} parent=1 // pred_check_branch
      %41 = sbr.rel (0) target = $region13
    $region12: #{tpu_custom_call.1} parent=1 // pred_region
      %s43 = ssub.s32 1024, 1024
      %44 = vsyncadd [#allocation6], %s43
      %s45 = sshll.u32 [#allocation7], 4
      %s46 = int_to_ptr.vmem [resolvable:$true] %s45
      %51 = dma.hbm_to_vmem [thread:$0]  %s2, 1024, %s46, [#allocation6], 64, 64, 4
    $region13: #{tpu_custom_call.1} parent=1 // pred_fallthru
      _
    // Predicated region
    $region14: #{tpu_custom_call.1} parent=1 // pred_check
      _
    $region15: #{tpu_custom_call.1} parent=1 // pred_check_branch
      %53 = sbr.rel (0) target = $region17
    $region16: #{tpu_custom_call.1} parent=1 // pred_region
      %s55 = ssub.s32 4096, 4096
      %56 = vsyncadd [#allocation9], %s55
      %s57 = sshll.u32 [#allocation8], 4
      %s58 = int_to_ptr.vmem [resolvable:$true] %s57
      %63 = dma.hbm_to_vmem [thread:$0]  %s3, 4096, %s58, [#allocation9], 256, 256, 16
    $region17: #{tpu_custom_call.1} parent=1 // pred_fallthru
      _
    // Predicated region
    $region18: #{tpu_custom_call.1} parent=1 // pred_check
      _
    $region19: #{tpu_custom_call.1} parent=1 // pred_check_branch
      %65 = sbr.rel (0) target = $region21
    $region20: #{tpu_custom_call.1} parent=1 // pred_region
      _
    $region21: #{tpu_custom_call.1} parent=1 // pred_fallthru
      _
    // Predicated region
    $region22: #{tpu_custom_call.1} parent=1 // pred_check
      _
    $region23: #{tpu_custom_call.1} parent=1 // pred_check_branch
      %67 = sbr.rel (0) target = $region25
    $region24: #{tpu_custom_call.1} parent=1 // pred_region
      %s69 = ssub.s32 4096, 4096
      %70 = vsyncadd [#allocation9], %s69
      %s71 = sshll.u32 [#allocation10], 4
      %s72 = int_to_ptr.vmem [resolvable:$true] %s71
      %77 = dma.hbm_to_vmem [thread:$0]  %s5, 4096, %s72, [#allocation9], 64, 64, 4
    $region25: #{tpu_custom_call.1} parent=1 // pred_fallthru
      _
    // Predicated region
    $region26: #{tpu_custom_call.1} parent=1 // pred_check
      _
    $region27: #{tpu_custom_call.1} parent=1 // pred_check_branch
      %79 = sbr.rel (0) target = $region29
    $region28: #{tpu_custom_call.1} parent=1 // pred_region
      _
    $region29: #{tpu_custom_call.1} parent=1 // pred_fallthru
      _
    // Predicated region
    $region30: #{tpu_custom_call.1} parent=1 // pred_check
      _
    $region31: #{tpu_custom_call.1} parent=1 // pred_check_branch
      %81 = sbr.rel (0) target = $region33
    $region32: #{tpu_custom_call.1} parent=1 // pred_region
      %82 = dma.done [#allocation3], 256
    $region33: #{tpu_custom_call.1} parent=1 // pred_fallthru
      _
    // Predicated region
    $region34: #{tpu_custom_call.1} parent=1 // pred_check
      _
    $region35: #{tpu_custom_call.1} parent=1 // pred_check_branch
      %84 = sbr.rel (0) target = $region37
    $region36: #{tpu_custom_call.1} parent=1 // pred_region
      %85 = dma.done [#allocation6], 3072
    $region37: #{tpu_custom_call.1} parent=1 // pred_fallthru
      _
    // Predicated region
    $region38: #{tpu_custom_call.1} parent=1 // pred_check
      _
    $region39: #{tpu_custom_call.1} parent=1 // pred_check_branch
      %87 = sbr.rel (0) target = $region41
    $region40: #{tpu_custom_call.1} parent=1 // pred_region
      %88 = dma.done [#allocation6], 1024
    $region41: #{tpu_custom_call.1} parent=1 // pred_fallthru
      _
    // Predicated region
    $region42: #{tpu_custom_call.1} parent=1 // pred_check
      _
    $region43: #{tpu_custom_call.1} parent=1 // pred_check_branch
      %90 = sbr.rel (0) target = $region45
    $region44: #{tpu_custom_call.1} parent=1 // pred_region
      %91 = dma.done [#allocation9], 4096
    $region45: #{tpu_custom_call.1} parent=1 // pred_fallthru
      _
    // Predicated region
    $region46: #{tpu_custom_call.1} parent=1 // pred_check
      _
    $region47: #{tpu_custom_call.1} parent=1 // pred_check_branch
      %93 = sbr.rel (0) target = $region49
    $region48: #{tpu_custom_call.1} parent=1 // pred_region
      %94 = dma.done [#allocation9], 4096
    $region49: #{tpu_custom_call.1} parent=1 // pred_fallthru
      _
    %v96 = vld [vmem:[#allocation2] sm:$0xff]
    %v97 = vld [vmem:[#allocation2 + $0x8] sm:$0xff]
    %v98 = vpack.c.bf16 %v97, %v96
    %v99 = vld [vmem:[#allocation5] sm:$0xff]
    %v100 = vld [vmem:[#allocation5 + $0x8] sm:$0xf]
    %v101 = vld [vmem:[#allocation5 + $0xc] sm:$0xff]
    %v102 = vld [vmem:[#allocation5 + $0x14] sm:$0xf]
    %v103 = vld [vmem:[#allocation5 + $0x18] sm:$0xff]
    %v104 = vld [vmem:[#allocation5 + $0x20] sm:$0xf]
    %v105 = vld [vmem:[#allocation5 + $0x24] sm:$0xff]
    %v106 = vld [vmem:[#allocation5 + $0x2c] sm:$0xf]
    %v107 = vld [vmem:[#allocation5 + $0x30] sm:$0xff]
    %v108 = vld [vmem:[#allocation5 + $0x38] sm:$0xf]
    %v109 = vld [vmem:[#allocation5 + $0x3c] sm:$0xff]
    %v110 = vld [vmem:[#allocation5 + $0x44] sm:$0xf]
    %v111 = vld [vmem:[#allocation5 + $0x48] sm:$0xff]
    %v112 = vld [vmem:[#allocation5 + $0x50] sm:$0xf]
    %v113 = vld [vmem:[#allocation5 + $0x54] sm:$0xff]
    %v114 = vld [vmem:[#allocation5 + $0x5c] sm:$0xf]
    %v115 = vld [vmem:[#allocation5 + $0x60] sm:$0xff]
    %v116 = vld [vmem:[#allocation5 + $0x68] sm:$0xf]
    %v117 = vld [vmem:[#allocation5 + $0x6c] sm:$0xff]
    %v118 = vld [vmem:[#allocation5 + $0x74] sm:$0xf]
    %v119 = vld [vmem:[#allocation5 + $0x78] sm:$0xff]
    %v120 = vld [vmem:[#allocation5 + $0x80] sm:$0xf]
    %v121 = vld [vmem:[#allocation5 + $0x84] sm:$0xff]
    %v122 = vld [vmem:[#allocation5 + $0x8c] sm:$0xf]
    %v123 = vld [vmem:[#allocation5 + $0x90] sm:$0xff]
    %v124 = vld [vmem:[#allocation5 + $0x98] sm:$0xf]
    %v125 = vld [vmem:[#allocation5 + $0x9c] sm:$0xff]
    %v126 = vld [vmem:[#allocation5 + $0xa4] sm:$0xf]
    %v127 = vld [vmem:[#allocation5 + $0xa8] sm:$0xff]
    %v128 = vld [vmem:[#allocation5 + $0xb0] sm:$0xf]
    %v129 = vld [vmem:[#allocation5 + $0xb4] sm:$0xff]
    %v130 = vld [vmem:[#allocation5 + $0xbc] sm:$0xf]
    %v163 = vunpack.c.l.b16 %v99
    %v164 = vunpack.c.h.b16 %v99
    %v165 = vunpack.c.l.b16 %v100
    %v166 = vunpack.c.l.b16 %v101
    %v167 = vunpack.c.h.b16 %v101
    %v168 = vunpack.c.l.b16 %v102
    %v169 = vunpack.c.l.b16 %v103
    %v170 = vunpack.c.h.b16 %v103
    %v171 = vunpack.c.l.b16 %v104
    %v172 = vunpack.c.l.b16 %v105
    %v173 = vunpack.c.h.b16 %v105
    %v174 = vunpack.c.l.b16 %v106
    %v175 = vunpack.c.l.b16 %v107
    %v176 = vunpack.c.h.b16 %v107
    %v177 = vunpack.c.l.b16 %v108
    %v178 = vunpack.c.l.b16 %v109
    %v179 = vunpack.c.h.b16 %v109
    %v180 = vunpack.c.l.b16 %v110
    %v181 = vunpack.c.l.b16 %v111
    %v182 = vunpack.c.h.b16 %v111
    %v183 = vunpack.c.l.b16 %v112
    %v184 = vunpack.c.l.b16 %v113
    %v185 = vunpack.c.h.b16 %v113
    %v186 = vunpack.c.l.b16 %v114
    %v187 = vunpack.c.l.b16 %v115
    %v188 = vunpack.c.h.b16 %v115
    %v189 = vunpack.c.l.b16 %v116
    %v190 = vunpack.c.l.b16 %v117
    %v191 = vunpack.c.h.b16 %v117
    %v192 = vunpack.c.l.b16 %v118
    %v193 = vunpack.c.l.b16 %v119
    %v194 = vunpack.c.h.b16 %v119
    %v195 = vunpack.c.l.b16 %v120
    %v196 = vunpack.c.l.b16 %v121
    %v197 = vunpack.c.h.b16 %v121
    %v198 = vunpack.c.l.b16 %v122
    %v199 = vunpack.c.l.b16 %v123
    %v200 = vunpack.c.h.b16 %v123
    %v201 = vunpack.c.l.b16 %v124
    %v202 = vunpack.c.l.b16 %v125
    %v203 = vunpack.c.h.b16 %v125
    %v204 = vunpack.c.l.b16 %v126
    %v205 = vunpack.c.l.b16 %v127
    %v206 = vunpack.c.h.b16 %v127
    %v207 = vunpack.c.l.b16 %v128
    %v208 = vunpack.c.l.b16 %v129
    %v209 = vunpack.c.h.b16 %v129
    %v210 = vunpack.c.l.b16 %v130
    %v211 = vpack.c.b16 %v166, %v163
    %v212 = vpack.c.b16 %v167, %v164
    %v213 = vpack.c.b16 %v168, %v165
    %v214 = vpack.c.b16 %v172, %v169
    %v215 = vpack.c.b16 %v173, %v170
    %v216 = vpack.c.b16 %v174, %v171
    %v217 = vpack.c.b16 %v178, %v175
    %v218 = vpack.c.b16 %v179, %v176
    %v219 = vpack.c.b16 %v180, %v177
    %v220 = vpack.c.b16 %v184, %v181
    %v221 = vpack.c.b16 %v185, %v182
    %v222 = vpack.c.b16 %v186, %v183
    %v223 = vpack.c.b16 %v190, %v187
    %v224 = vpack.c.b16 %v191, %v188
    %v225 = vpack.c.b16 %v192, %v189
    %v226 = vpack.c.b16 %v196, %v193
    %v227 = vpack.c.b16 %v197, %v194
    %v228 = vpack.c.b16 %v198, %v195
    %v229 = vpack.c.b16 %v202, %v199
    %v230 = vpack.c.b16 %v203, %v200
    %v231 = vpack.c.b16 %v204, %v201
    %v232 = vpack.c.b16 %v208, %v205
    %v233 = vpack.c.b16 %v209, %v206
    %v234 = vpack.c.b16 %v210, %v207
    %259 = vmatprep.subr.bf16.mxu0 %v233
    %260 = vmatpush1.bf16.msra.mxu0 %v232
    %261 = vmatprep.subr.bf16.mxu0 %v230
    %262 = vmatpush1.bf16.msra.mxu0 %v229
    %263 = vmatprep.subr.bf16.mxu0 %v227
    %264 = vmatpush1.bf16.msra.mxu0 %v226
    %265 = vmatprep.subr.bf16.mxu0 %v224
    %266 = vmatpush1.bf16.msra.mxu0 %v223
    %267 = vmatprep.subr.bf16.mxu0 %v221
    %268 = vmatpush1.bf16.msra.mxu0 %v220
    %269 = vmatprep.subr.bf16.mxu0 %v218
    %270 = vmatpush1.bf16.msra.mxu0 %v217
    %271 = vmatprep.subr.bf16.mxu0 %v215
    %272 = vmatpush1.bf16.msra.mxu0 %v214
    %273 = vmatprep.subr.bf16.mxu0 %v212
    %274 = vmatpush1.bf16.msra.mxu0 %v211
    %275 = vmatprep.subr.bf16.mxu0 0
    %276 = vmatpush2.bf16.msra.mxu0 0
    %277 = vmatprep.subr.bf16.mxu0 0
    %278 = vmatpush2.bf16.msra.mxu0 0
    %279 = vmatprep.subr.bf16.mxu0 0
    %280 = vmatpush2.bf16.msra.mxu0 0
    %281 = vmatprep.subr.bf16.mxu0 0
    %282 = vmatpush2.bf16.msra.mxu0 0
    %283 = vmatprep.subr.bf16.mxu0 0
    %284 = vmatpush2.bf16.msra.mxu0 0
    %285 = vmatprep.subr.bf16.mxu0 0
    %286 = vmatpush2.bf16.msra.mxu0 0
    %287 = vmatprep.subr.bf16.mxu0 0
    %288 = vmatpush2.bf16.msra.mxu0 0
    %289 = vmatprep.subr.bf16.mxu0 0
    %290 = vmatpush2.bf16.msra.mxu0 0
    %291 = vmatprep.mubr.bf16.mxu0 0
    %292 = vmatmul.mubr.bf16.gmra.mxu0 %v98
    %v293 = vpop.f32.mrf.mxu0
    %v294 = vadd.f32 0.0, %v293
    %v295 = vpop.f32.mrf.mxu0
    %v296 = vadd.f32 0.0, %v295
    %v297 = vpop.f32.mrf.mxu0
    %v298 = vadd.f32 0.0, %v297
    %v299 = vpop.f32.mrf.mxu0
    %v300 = vadd.f32 0.0, %v299
    %301 = vdwg.mxu0
    %302 = vmatprep.subr.bf16.mxu0 0
    %303 = vmatpush1.bf16.msra.mxu0 %v234
    %304 = vmatprep.subr.bf16.mxu0 0
    %305 = vmatpush1.bf16.msra.mxu0 %v231
    %306 = vmatprep.subr.bf16.mxu0 0
    %307 = vmatpush1.bf16.msra.mxu0 %v228
    %308 = vmatprep.subr.bf16.mxu0 0
    %309 = vmatpush1.bf16.msra.mxu0 %v225
    %310 = vmatprep.subr.bf16.mxu0 0
    %311 = vmatpush1.bf16.msra.mxu0 %v222
    %312 = vmatprep.subr.bf16.mxu0 0
    %313 = vmatpush1.bf16.msra.mxu0 %v219
    %314 = vmatprep.subr.bf16.mxu0 0
    %315 = vmatpush1.bf16.msra.mxu0 %v216
    %316 = vmatprep.subr.bf16.mxu0 0
    %317 = vmatpush1.bf16.msra.mxu0 %v213
    %318 = vmatprep.subr.bf16.mxu0 0
    %319 = vmatpush2.bf16.msra.mxu0 0
    %320 = vmatprep.subr.bf16.mxu0 0
    %321 = vmatpush2.bf16.msra.mxu0 0
    %322 = vmatprep.subr.bf16.mxu0 0
    %323 = vmatpush2.bf16.msra.mxu0 0
    %324 = vmatprep.subr.bf16.mxu0 0
    %325 = vmatpush2.bf16.msra.mxu0 0
    %326 = vmatprep.subr.bf16.mxu0 0
    %327 = vmatpush2.bf16.msra.mxu0 0
    %328 = vmatprep.subr.bf16.mxu0 0
    %329 = vmatpush2.bf16.msra.mxu0 0
    %330 = vmatprep.subr.bf16.mxu0 0
    %331 = vmatpush2.bf16.msra.mxu0 0
    %332 = vmatprep.subr.bf16.mxu0 0
    %333 = vmatpush2.bf16.msra.mxu0 0
    %334 = vmatprep.mubr.bf16.mxu0 0
    %335 = vmatmul.mubr.bf16.gmra.mxu0 %v98
    %v336 = vpop.f32.mrf.mxu0
    %v337 = vadd.f32 0.0, %v336
    %v338 = vpop.f32.mrf.mxu0
    %v339 = vpop.f32.mrf.mxu0
    %v340 = vadd.f32 0.0, %v339
    %v341 = vpop.f32.mrf.mxu0
    %342 = vdwg.mxu0
    %v343 = vpack.c.bf16 %v298, %v294
    %v344 = vpack.c.bf16 %v300, %v296
    %v345 = vpack.c.bf16 %v340, %v337
    %v346 = vlaneseq
    %v347 = vshrl.u32 %v346, 7
    %v348 = vlaneseq
    %v349 = vand.u32 %v348, 127
    %vm350 = vcmp.le.s32.totalorder %v349, %v347
    %vm351 = vcmask 261120
    %v353 = vsel %vm351, %v343, 0
    %v356 = vsel %vm351, %v344, 0
    %358 = vmatprep.subr.bf16.mxu0 0
    %359 = vmatpush1.bf16.xpose.msra.mxu0 0
    %360 = vmatprep.subr.bf16.mxu0 0
    %361 = vmatpush1.bf16.xpose.msra.mxu0 0
    %362 = vmatprep.subr.bf16.mxu0 0
    %363 = vmatpush1.bf16.xpose.msra.mxu0 0
    %364 = vmatprep.subr.bf16.mxu0 0
    %365 = vmatpush1.bf16.xpose.msra.mxu0 0
    %366 = vmatprep.subr.bf16.mxu0 0
    %367 = vmatpush1.bf16.xpose.msra.mxu0 0
    %368 = vmatprep.subr.bf16.mxu0 0
    %369 = vmatpush1.bf16.xpose.msra.mxu0 0
    %370 = vmatprep.subr.bf16.mxu0 0
    %371 = vmatpush1.bf16.xpose.msra.mxu0 0
    %372 = vmatprep.subr.bf16.mxu0 0
    %373 = vmatpush1.bf16.xpose.msra.mxu0 %v356
    %374 = vmatprep.subr.bf16.mxu0 0
    %375 = vmatpush2.bf16.xpose.msra.mxu0 0
    %376 = vmatprep.subr.bf16.mxu0 0
    %377 = vmatpush2.bf16.xpose.msra.mxu0 0
    %378 = vmatprep.subr.bf16.mxu0 0
    %379 = vmatpush2.bf16.xpose.msra.mxu0 0
    %380 = vmatprep.subr.bf16.mxu0 0
    %381 = vmatpush2.bf16.xpose.msra.mxu0 0
    %382 = vmatprep.subr.bf16.mxu0 0
    %383 = vmatpush2.bf16.xpose.msra.mxu0 0
    %384 = vmatprep.subr.bf16.mxu0 0
    %385 = vmatpush2.bf16.xpose.msra.mxu0 0
    %386 = vmatprep.subr.bf16.mxu0 0
    %387 = vmatpush2.bf16.xpose.msra.mxu0 0
    %388 = vmatprep.subr.bf16.mxu0 0
    %389 = vmatpush2.bf16.xpose.msra.mxu0 0
    %390 = vmatprep.mubr.bf16.mxu0 0
    %391 = vmatmul.mubr.bf16.gmra.mxu0 %v353
    %v392 = vpop.f32.mrf.mxu0
    %v393 = vadd.f32 0.0, %v392
    %v394 = vpop.f32.mrf.mxu0
    %v395 = vpop.f32.mrf.mxu0
    %v396 = vpop.f32.mrf.mxu0
    %397 = vdwg.mxu0
    %v398 = vsel %vm350, %v393, -1e+10
    %vm399 = vcmask 64512
    %v400 = vsel %vm399, %v398, -inf
    %401 = vmax.xlane.f32.xlu0 %v400
    %v402 = vpop.xlane.xlu0 %401
    %v403 = vsub.f32 %v398, %v402
    %v404 = vmul.f32 %v403, 1.442695
    %v405 = vpow.pop %v404
    %v406 = vsel %vm399, %v405, 0.0
    %407 = vadd.xlane.f32.xlu0 %v406
    %v408 = vpop.xlane.xlu0 %407
    %v409 = vpack.c.bf16 %v405, %v405
    %v411 = vsel %vm399, %v409, 0
    %vm413 = vcmask 1043456
    %v415 = vsel %vm413, %v345, 0
    %417 = vmatprep.subr.bf16.mxu0 0
    %418 = vmatpush1.bf16.msra.mxu0 0
    %419 = vmatprep.subr.bf16.mxu0 0
    %420 = vmatpush1.bf16.msra.mxu0 0
    %421 = vmatprep.subr.bf16.mxu0 0
    %422 = vmatpush1.bf16.msra.mxu0 0
    %423 = vmatprep.subr.bf16.mxu0 0
    %424 = vmatpush1.bf16.msra.mxu0 0
    %425 = vmatprep.subr.bf16.mxu0 0
    %426 = vmatpush1.bf16.msra.mxu0 0
    %427 = vmatprep.subr.bf16.mxu0 0
    %428 = vmatpush1.bf16.msra.mxu0 0
    %429 = vmatprep.subr.bf16.mxu0 0
    %430 = vmatpush1.bf16.msra.mxu0 0
    %431 = vmatprep.subr.bf16.mxu0 0
    %432 = vmatpush1.bf16.msra.mxu0 %v415
    %433 = vmatprep.subr.bf16.mxu0 0
    %434 = vmatpush2.bf16.msra.mxu0 0
    %435 = vmatprep.subr.bf16.mxu0 0
    %436 = vmatpush2.bf16.msra.mxu0 0
    %437 = vmatprep.subr.bf16.mxu0 0
    %438 = vmatpush2.bf16.msra.mxu0 0
    %439 = vmatprep.subr.bf16.mxu0 0
    %440 = vmatpush2.bf16.msra.mxu0 0
    %441 = vmatprep.subr.bf16.mxu0 0
    %442 = vmatpush2.bf16.msra.mxu0 0
    %443 = vmatprep.subr.bf16.mxu0 0
    %444 = vmatpush2.bf16.msra.mxu0 0
    %445 = vmatprep.subr.bf16.mxu0 0
    %446 = vmatpush2.bf16.msra.mxu0 0
    %447 = vmatprep.subr.bf16.mxu0 0
    %448 = vmatpush2.bf16.msra.mxu0 0
    %449 = vmatprep.mubr.bf16.mxu0 0
    %450 = vmatmul.mubr.bf16.gmra.mxu0 %v411
    %v451 = vpop.f32.mrf.mxu0
    %v452 = vadd.f32 0.0, %v451
    %v453 = vpop.f32.mrf.mxu0
    %v454 = vpop.f32.mrf.mxu0
    %v455 = vpop.f32.mrf.mxu0
    %456 = vdwg.mxu0
    %v457 = vrcp.pop %v408
    %v458 = vmul.f32 %v452, %v457
    %460 = vrot.lane.b32.xlu0 %v343, 96
    %v461 = vpop.permute.xlu0 %460
    %463 = vrot.lane.b32.xlu0 %v344, 96
    %v464 = vpop.permute.xlu0 %463
    %v466 = vsel %vm351, %v461, 0
    %v469 = vsel %vm351, %v464, 0
    %471 = vmatprep.subr.bf16.mxu0 0
    %472 = vmatpush1.bf16.xpose.msra.mxu0 0
    %473 = vmatprep.subr.bf16.mxu0 0
    %474 = vmatpush1.bf16.xpose.msra.mxu0 0
    %475 = vmatprep.subr.bf16.mxu0 0
    %476 = vmatpush1.bf16.xpose.msra.mxu0 0
    %477 = vmatprep.subr.bf16.mxu0 0
    %478 = vmatpush1.bf16.xpose.msra.mxu0 0
    %479 = vmatprep.subr.bf16.mxu0 0
    %480 = vmatpush1.bf16.xpose.msra.mxu0 0
    %481 = vmatprep.subr.bf16.mxu0 0
    %482 = vmatpush1.bf16.xpose.msra.mxu0 0
    %483 = vmatprep.subr.bf16.mxu0 0
    %484 = vmatpush1.bf16.xpose.msra.mxu0 0
    %485 = vmatprep.subr.bf16.mxu0 0
    %486 = vmatpush1.bf16.xpose.msra.mxu0 %v469
    %487 = vmatprep.subr.bf16.mxu0 0
    %488 = vmatpush2.bf16.xpose.msra.mxu0 0
    %489 = vmatprep.subr.bf16.mxu0 0
    %490 = vmatpush2.bf16.xpose.msra.mxu0 0
    %491 = vmatprep.subr.bf16.mxu0 0
    %492 = vmatpush2.bf16.xpose.msra.mxu0 0
    %493 = vmatprep.subr.bf16.mxu0 0
    %494 = vmatpush2.bf16.xpose.msra.mxu0 0
    %495 = vmatprep.subr.bf16.mxu0 0
    %496 = vmatpush2.bf16.xpose.msra.mxu0 0
    %497 = vmatprep.subr.bf16.mxu0 0
    %498 = vmatpush2.bf16.xpose.msra.mxu0 0
    %499 = vmatprep.subr.bf16.mxu0 0
    %500 = vmatpush2.bf16.xpose.msra.mxu0 0
    %501 = vmatprep.subr.bf16.mxu0 0
    %502 = vmatpush2.bf16.xpose.msra.mxu0 0
    %503 = vmatprep.mubr.bf16.mxu0 0
    %504 = vmatmul.mubr.bf16.gmra.mxu0 %v466
    %v505 = vpop.f32.mrf.mxu0
    %v506 = vadd.f32 0.0, %v505
    %v507 = vpop.f32.mrf.mxu0
    %v508 = vpop.f32.mrf.mxu0
    %v509 = vpop.f32.mrf.mxu0
    %510 = vdwg.mxu0
    %v511 = vsel %vm350, %v506, -1e+10
    %v512 = vsel %vm399, %v511, -inf
    %513 = vmax.xlane.f32.xlu0 %v512
    %v514 = vpop.xlane.xlu0 %513
    %v515 = vsub.f32 %v511, %v514
    %v516 = vmul.f32 %v515, 1.442695
    %v517 = vpow.pop %v516
    %v518 = vsel %vm399, %v517, 0.0
    %519 = vadd.xlane.f32.xlu0 %v518
    %v520 = vpop.xlane.xlu0 %519
    %v521 = vpack.c.bf16 %v517, %v517
    %523 = vrot.lane.b32.xlu0 %v345, 96
    %v524 = vpop.permute.xlu0 %523
    %v526 = vsel %vm399, %v521, 0
    %v529 = vsel %vm413, %v524, 0
    %531 = vmatprep.subr.bf16.mxu0 0
    %532 = vmatpush1.bf16.msra.mxu0 0
    %533 = vmatprep.subr.bf16.mxu0 0
    %534 = vmatpush1.bf16.msra.mxu0 0
    %535 = vmatprep.subr.bf16.mxu0 0
    %536 = vmatpush1.bf16.msra.mxu0 0
    %537 = vmatprep.subr.bf16.mxu0 0
    %538 = vmatpush1.bf16.msra.mxu0 0
    %539 = vmatprep.subr.bf16.mxu0 0
    %540 = vmatpush1.bf16.msra.mxu0 0
    %541 = vmatprep.subr.bf16.mxu0 0
    %542 = vmatpush1.bf16.msra.mxu0 0
    %543 = vmatprep.subr.bf16.mxu0 0
    %544 = vmatpush1.bf16.msra.mxu0 0
    %545 = vmatprep.subr.bf16.mxu0 0
    %546 = vmatpush1.bf16.msra.mxu0 %v529
    %547 = vmatprep.subr.bf16.mxu0 0
    %548 = vmatpush2.bf16.msra.mxu0 0
    %549 = vmatprep.subr.bf16.mxu0 0
    %550 = vmatpush2.bf16.msra.mxu0 0
    %551 = vmatprep.subr.bf16.mxu0 0
    %552 = vmatpush2.bf16.msra.mxu0 0
    %553 = vmatprep.subr.bf16.mxu0 0
    %554 = vmatpush2.bf16.msra.mxu0 0
    %555 = vmatprep.subr.bf16.mxu0 0
    %556 = vmatpush2.bf16.msra.mxu0 0
    %557 = vmatprep.subr.bf16.mxu0 0
    %558 = vmatpush2.bf16.msra.mxu0 0
    %559 = vmatprep.subr.bf16.mxu0 0
    %560 = vmatpush2.bf16.msra.mxu0 0
    %561 = vmatprep.subr.bf16.mxu0 0
    %562 = vmatpush2.bf16.msra.mxu0 0
    %563 = vmatprep.mubr.bf16.mxu0 0
    %564 = vmatmul.mubr.bf16.gmra.mxu0 %v526
    %v565 = vpop.f32.mrf.mxu0
    %v566 = vadd.f32 0.0, %v565
    %v567 = vpop.f32.mrf.mxu0
    %v568 = vpop.f32.mrf.mxu0
    %v569 = vpop.f32.mrf.mxu0
    %570 = vdwg.mxu0
    %v571 = vrcp.pop %v520
    %v572 = vmul.f32 %v566, %v571
    %573 = vrot.lane.b32.xlu0 %v343, 64
    %v574 = vpop.permute.xlu0 %573
    %575 = vrot.lane.b32.xlu0 %v344, 64
    %v576 = vpop.permute.xlu0 %575
    %v578 = vsel %vm351, %v574, 0
    %v581 = vsel %vm351, %v576, 0
    %583 = vmatprep.subr.bf16.mxu0 0
    %584 = vmatpush1.bf16.xpose.msra.mxu0 0
    %585 = vmatprep.subr.bf16.mxu0 0
    %586 = vmatpush1.bf16.xpose.msra.mxu0 0
    %587 = vmatprep.subr.bf16.mxu0 0
    %588 = vmatpush1.bf16.xpose.msra.mxu0 0
    %589 = vmatprep.subr.bf16.mxu0 0
    %590 = vmatpush1.bf16.xpose.msra.mxu0 0
    %591 = vmatprep.subr.bf16.mxu0 0
    %592 = vmatpush1.bf16.xpose.msra.mxu0 0
    %593 = vmatprep.subr.bf16.mxu0 0
    %594 = vmatpush1.bf16.xpose.msra.mxu0 0
    %595 = vmatprep.subr.bf16.mxu0 0
    %596 = vmatpush1.bf16.xpose.msra.mxu0 0
    %597 = vmatprep.subr.bf16.mxu0 0
    %598 = vmatpush1.bf16.xpose.msra.mxu0 %v581
    %599 = vmatprep.subr.bf16.mxu0 0
    %600 = vmatpush2.bf16.xpose.msra.mxu0 0
    %601 = vmatprep.subr.bf16.mxu0 0
    %602 = vmatpush2.bf16.xpose.msra.mxu0 0
    %603 = vmatprep.subr.bf16.mxu0 0
    %604 = vmatpush2.bf16.xpose.msra.mxu0 0
    %605 = vmatprep.subr.bf16.mxu0 0
    %606 = vmatpush2.bf16.xpose.msra.mxu0 0
    %607 = vmatprep.subr.bf16.mxu0 0
    %608 = vmatpush2.bf16.xpose.msra.mxu0 0
    %609 = vmatprep.subr.bf16.mxu0 0
    %610 = vmatpush2.bf16.xpose.msra.mxu0 0
    %611 = vmatprep.subr.bf16.mxu0 0
    %612 = vmatpush2.bf16.xpose.msra.mxu0 0
    %613 = vmatprep.subr.bf16.mxu0 0
    %614 = vmatpush2.bf16.xpose.msra.mxu0 0
    %615 = vmatprep.mubr.bf16.mxu0 0
    %616 = vmatmul.mubr.bf16.gmra.mxu0 %v578
    %v617 = vpop.f32.mrf.mxu0
    %v618 = vadd.f32 0.0, %v617
    %v619 = vpop.f32.mrf.mxu0
    %v620 = vpop.f32.mrf.mxu0
    %v621 = vpop.f32.mrf.mxu0
    %622 = vdwg.mxu0
    %v623 = vsel %vm350, %v618, -1e+10
    %v624 = vsel %vm399, %v623, -inf
    %625 = vmax.xlane.f32.xlu0 %v624
    %v626 = vpop.xlane.xlu0 %625
    %v627 = vsub.f32 %v623, %v626
    %v628 = vmul.f32 %v627, 1.442695
    %v629 = vpow.pop %v628
    %v630 = vsel %vm399, %v629, 0.0
    %631 = vadd.xlane.f32.xlu0 %v630
    %v632 = vpop.xlane.xlu0 %631
    %v633 = vpack.c.bf16 %v629, %v629
    %634 = vrot.lane.b32.xlu0 %v345, 64
    %v635 = vpop.permute.xlu0 %634
    %v637 = vsel %vm399, %v633, 0
    %v640 = vsel %vm413, %v635, 0
    %642 = vmatprep.subr.bf16.mxu0 0
    %643 = vmatpush1.bf16.msra.mxu0 0
    %644 = vmatprep.subr.bf16.mxu0 0
    %645 = vmatpush1.bf16.msra.mxu0 0
    %646 = vmatprep.subr.bf16.mxu0 0
    %647 = vmatpush1.bf16.msra.mxu0 0
    %648 = vmatprep.subr.bf16.mxu0 0
    %649 = vmatpush1.bf16.msra.mxu0 0
    %650 = vmatprep.subr.bf16.mxu0 0
    %651 = vmatpush1.bf16.msra.mxu0 0
    %652 = vmatprep.subr.bf16.mxu0 0
    %653 = vmatpush1.bf16.msra.mxu0 0
    %654 = vmatprep.subr.bf16.mxu0 0
    %655 = vmatpush1.bf16.msra.mxu0 0
    %656 = vmatprep.subr.bf16.mxu0 0
    %657 = vmatpush1.bf16.msra.mxu0 %v640
    %658 = vmatprep.subr.bf16.mxu0 0
    %659 = vmatpush2.bf16.msra.mxu0 0
    %660 = vmatprep.subr.bf16.mxu0 0
    %661 = vmatpush2.bf16.msra.mxu0 0
    %662 = vmatprep.subr.bf16.mxu0 0
    %663 = vmatpush2.bf16.msra.mxu0 0
    %664 = vmatprep.subr.bf16.mxu0 0
    %665 = vmatpush2.bf16.msra.mxu0 0
    %666 = vmatprep.subr.bf16.mxu0 0
    %667 = vmatpush2.bf16.msra.mxu0 0
    %668 = vmatprep.subr.bf16.mxu0 0
    %669 = vmatpush2.bf16.msra.mxu0 0
    %670 = vmatprep.subr.bf16.mxu0 0
    %671 = vmatpush2.bf16.msra.mxu0 0
    %672 = vmatprep.subr.bf16.mxu0 0
    %673 = vmatpush2.bf16.msra.mxu0 0
    %674 = vmatprep.mubr.bf16.mxu0 0
    %675 = vmatmul.mubr.bf16.gmra.mxu0 %v637
    %v676 = vpop.f32.mrf.mxu0
    %v677 = vadd.f32 0.0, %v676
    %v678 = vpop.f32.mrf.mxu0
    %v679 = vpop.f32.mrf.mxu0
    %v680 = vpop.f32.mrf.mxu0
    %681 = vdwg.mxu0
    %v682 = vrcp.pop %v632
    %v683 = vmul.f32 %v677, %v682
    %684 = vrot.lane.b32.xlu0 %v343, 32
    %v685 = vpop.permute.xlu0 %684
    %686 = vrot.lane.b32.xlu0 %v344, 32
    %v687 = vpop.permute.xlu0 %686
    %v689 = vsel %vm351, %v685, 0
    %v692 = vsel %vm351, %v687, 0
    %694 = vmatprep.subr.bf16.mxu0 0
    %695 = vmatpush1.bf16.xpose.msra.mxu0 0
    %696 = vmatprep.subr.bf16.mxu0 0
    %697 = vmatpush1.bf16.xpose.msra.mxu0 0
    %698 = vmatprep.subr.bf16.mxu0 0
    %699 = vmatpush1.bf16.xpose.msra.mxu0 0
    %700 = vmatprep.subr.bf16.mxu0 0
    %701 = vmatpush1.bf16.xpose.msra.mxu0 0
    %702 = vmatprep.subr.bf16.mxu0 0
    %703 = vmatpush1.bf16.xpose.msra.mxu0 0
    %704 = vmatprep.subr.bf16.mxu0 0
    %705 = vmatpush1.bf16.xpose.msra.mxu0 0
    %706 = vmatprep.subr.bf16.mxu0 0
    %707 = vmatpush1.bf16.xpose.msra.mxu0 0
    %708 = vmatprep.subr.bf16.mxu0 0
    %709 = vmatpush1.bf16.xpose.msra.mxu0 %v692
    %710 = vmatprep.subr.bf16.mxu0 0
    %711 = vmatpush2.bf16.xpose.msra.mxu0 0
    %712 = vmatprep.subr.bf16.mxu0 0
    %713 = vmatpush2.bf16.xpose.msra.mxu0 0
    %714 = vmatprep.subr.bf16.mxu0 0
    %715 = vmatpush2.bf16.xpose.msra.mxu0 0
    %716 = vmatprep.subr.bf16.mxu0 0
    %717 = vmatpush2.bf16.xpose.msra.mxu0 0
    %718 = vmatprep.subr.bf16.mxu0 0
    %719 = vmatpush2.bf16.xpose.msra.mxu0 0
    %720 = vmatprep.subr.bf16.mxu0 0
    %721 = vmatpush2.bf16.xpose.msra.mxu0 0
    %722 = vmatprep.subr.bf16.mxu0 0
    %723 = vmatpush2.bf16.xpose.msra.mxu0 0
    %724 = vmatprep.subr.bf16.mxu0 0
    %725 = vmatpush2.bf16.xpose.msra.mxu0 0
    %726 = vmatprep.mubr.bf16.mxu0 0
    %727 = vmatmul.mubr.bf16.gmra.mxu0 %v689
    %v728 = vpop.f32.mrf.mxu0
    %v729 = vadd.f32 0.0, %v728
    %v730 = vpop.f32.mrf.mxu0
    %v731 = vpop.f32.mrf.mxu0
    %v732 = vpop.f32.mrf.mxu0
    %733 = vdwg.mxu0
    %v734 = vsel %vm350, %v729, -1e+10
    %v735 = vsel %vm399, %v734, -inf
    %736 = vmax.xlane.f32.xlu0 %v735
    %v737 = vpop.xlane.xlu0 %736
    %v738 = vsub.f32 %v734, %v737
    %v739 = vmul.f32 %v738, 1.442695
    %v740 = vpow.pop %v739
    %v741 = vsel %vm399, %v740, 0.0
    %742 = vadd.xlane.f32.xlu0 %v741
    %v743 = vpop.xlane.xlu0 %742
    %v744 = vpack.c.bf16 %v740, %v740
    %745 = vrot.lane.b32.xlu0 %v345, 32
    %v746 = vpop.permute.xlu0 %745
    %v748 = vsel %vm399, %v744, 0
    %v751 = vsel %vm413, %v746, 0
    %753 = vmatprep.subr.bf16.mxu0 0
    %754 = vmatpush1.bf16.msra.mxu0 0
    %755 = vmatprep.subr.bf16.mxu0 0
    %756 = vmatpush1.bf16.msra.mxu0 0
    %757 = vmatprep.subr.bf16.mxu0 0
    %758 = vmatpush1.bf16.msra.mxu0 0
    %759 = vmatprep.subr.bf16.mxu0 0
    %760 = vmatpush1.bf16.msra.mxu0 0
    %761 = vmatprep.subr.bf16.mxu0 0
    %762 = vmatpush1.bf16.msra.mxu0 0
    %763 = vmatprep.subr.bf16.mxu0 0
    %764 = vmatpush1.bf16.msra.mxu0 0
    %765 = vmatprep.subr.bf16.mxu0 0
    %766 = vmatpush1.bf16.msra.mxu0 0
    %767 = vmatprep.subr.bf16.mxu0 0
    %768 = vmatpush1.bf16.msra.mxu0 %v751
    %769 = vmatprep.subr.bf16.mxu0 0
    %770 = vmatpush2.bf16.msra.mxu0 0
    %771 = vmatprep.subr.bf16.mxu0 0
    %772 = vmatpush2.bf16.msra.mxu0 0
    %773 = vmatprep.subr.bf16.mxu0 0
    %774 = vmatpush2.bf16.msra.mxu0 0
    %775 = vmatprep.subr.bf16.mxu0 0
    %776 = vmatpush2.bf16.msra.mxu0 0
    %777 = vmatprep.subr.bf16.mxu0 0
    %778 = vmatpush2.bf16.msra.mxu0 0
    %779 = vmatprep.subr.bf16.mxu0 0
    %780 = vmatpush2.bf16.msra.mxu0 0
    %781 = vmatprep.subr.bf16.mxu0 0
    %782 = vmatpush2.bf16.msra.mxu0 0
    %783 = vmatprep.subr.bf16.mxu0 0
    %784 = vmatpush2.bf16.msra.mxu0 0
    %785 = vmatprep.mubr.bf16.mxu0 0
    %786 = vmatmul.mubr.bf16.gmra.mxu0 %v748
    %v787 = vpop.f32.mrf.mxu0
    %v788 = vadd.f32 0.0, %v787
    %v789 = vpop.f32.mrf.mxu0
    %v790 = vpop.f32.mrf.mxu0
    %v791 = vpop.f32.mrf.mxu0
    %792 = vdwg.mxu0
    %v793 = vrcp.pop %v743
    %v794 = vmul.f32 %v788, %v793
    %796 = vrot.lane.b32.xlu0 %v572, 32
    %v797 = vpop.permute.xlu0 %796
    %800 = vrot.lane.b32.xlu0 %v683, 64
    %v801 = vpop.permute.xlu0 %800
    %804 = vrot.lane.b32.xlu0 %v794, 96
    %v805 = vpop.permute.xlu0 %804
    %v807 = vsel %vm351, %v458, %v797
    %vm808 = vcmask 523264
    %v809 = vsel %vm808, %v807, %v801
    %vm810 = vcmask 785408
    %v811 = vsel %vm810, %v809, %v805
    %v812 = vrot.slane %v343, 4
    %v813 = vrot.slane %v344, 4
    %v815 = vsel %vm351, %v812, 0
    %v818 = vsel %vm351, %v813, 0
    %820 = vmatprep.subr.bf16.mxu0 0
    %821 = vmatpush1.bf16.xpose.msra.mxu0 0
    %822 = vmatprep.subr.bf16.mxu0 0
    %823 = vmatpush1.bf16.xpose.msra.mxu0 0
    %824 = vmatprep.subr.bf16.mxu0 0
    %825 = vmatpush1.bf16.xpose.msra.mxu0 0
    %826 = vmatprep.subr.bf16.mxu0 0
    %827 = vmatpush1.bf16.xpose.msra.mxu0 0
    %828 = vmatprep.subr.bf16.mxu0 0
    %829 = vmatpush1.bf16.xpose.msra.mxu0 0
    %830 = vmatprep.subr.bf16.mxu0 0
    %831 = vmatpush1.bf16.xpose.msra.mxu0 0
    %832 = vmatprep.subr.bf16.mxu0 0
    %833 = vmatpush1.bf16.xpose.msra.mxu0 0
    %834 = vmatprep.subr.bf16.mxu0 0
    %835 = vmatpush1.bf16.xpose.msra.mxu0 %v818
    %836 = vmatprep.subr.bf16.mxu0 0
    %837 = vmatpush2.bf16.xpose.msra.mxu0 0
    %838 = vmatprep.subr.bf16.mxu0 0
    %839 = vmatpush2.bf16.xpose.msra.mxu0 0
    %840 = vmatprep.subr.bf16.mxu0 0
    %841 = vmatpush2.bf16.xpose.msra.mxu0 0
    %842 = vmatprep.subr.bf16.mxu0 0
    %843 = vmatpush2.bf16.xpose.msra.mxu0 0
    %844 = vmatprep.subr.bf16.mxu0 0
    %845 = vmatpush2.bf16.xpose.msra.mxu0 0
    %846 = vmatprep.subr.bf16.mxu0 0
    %847 = vmatpush2.bf16.xpose.msra.mxu0 0
    %848 = vmatprep.subr.bf16.mxu0 0
    %849 = vmatpush2.bf16.xpose.msra.mxu0 0
    %850 = vmatprep.subr.bf16.mxu0 0
    %851 = vmatpush2.bf16.xpose.msra.mxu0 0
    %852 = vmatprep.mubr.bf16.mxu0 0
    %853 = vmatmul.mubr.bf16.gmra.mxu0 %v815
    %v854 = vpop.f32.mrf.mxu0
    %v855 = vadd.f32 0.0, %v854
    %v856 = vpop.f32.mrf.mxu0
    %v857 = vpop.f32.mrf.mxu0
    %v858 = vpop.f32.mrf.mxu0
    %859 = vdwg.mxu0
    %v860 = vsel %vm350, %v855, -1e+10
    %v861 = vsel %vm399, %v860, -inf
    %862 = vmax.xlane.f32.xlu0 %v861
    %v863 = vpop.xlane.xlu0 %862
    %v864 = vsub.f32 %v860, %v863
    %v865 = vmul.f32 %v864, 1.442695
    %v866 = vpow.pop %v865
    %v867 = vsel %vm399, %v866, 0.0
    %868 = vadd.xlane.f32.xlu0 %v867
    %v869 = vpop.xlane.xlu0 %868
    %v870 = vpack.c.bf16 %v866, %v866
    %v871 = vrot.slane %v345, 4
    %v873 = vsel %vm399, %v870, 0
    %v876 = vsel %vm413, %v871, 0
    %878 = vmatprep.subr.bf16.mxu0 0
    %879 = vmatpush1.bf16.msra.mxu0 0
    %880 = vmatprep.subr.bf16.mxu0 0
    %881 = vmatpush1.bf16.msra.mxu0 0
    %882 = vmatprep.subr.bf16.mxu0 0
    %883 = vmatpush1.bf16.msra.mxu0 0
    %884 = vmatprep.subr.bf16.mxu0 0
    %885 = vmatpush1.bf16.msra.mxu0 0
    %886 = vmatprep.subr.bf16.mxu0 0
    %887 = vmatpush1.bf16.msra.mxu0 0
    %888 = vmatprep.subr.bf16.mxu0 0
    %889 = vmatpush1.bf16.msra.mxu0 0
    %890 = vmatprep.subr.bf16.mxu0 0
    %891 = vmatpush1.bf16.msra.mxu0 0
    %892 = vmatprep.subr.bf16.mxu0 0
    %893 = vmatpush1.bf16.msra.mxu0 %v876
    %894 = vmatprep.subr.bf16.mxu0 0
    %895 = vmatpush2.bf16.msra.mxu0 0
    %896 = vmatprep.subr.bf16.mxu0 0
    %897 = vmatpush2.bf16.msra.mxu0 0
    %898 = vmatprep.subr.bf16.mxu0 0
    %899 = vmatpush2.bf16.msra.mxu0 0
    %900 = vmatprep.subr.bf16.mxu0 0
    %901 = vmatpush2.bf16.msra.mxu0 0
    %902 = vmatprep.subr.bf16.mxu0 0
    %903 = vmatpush2.bf16.msra.mxu0 0
    %904 = vmatprep.subr.bf16.mxu0 0
    %905 = vmatpush2.bf16.msra.mxu0 0
    %906 = vmatprep.subr.bf16.mxu0 0
    %907 = vmatpush2.bf16.msra.mxu0 0
    %908 = vmatprep.subr.bf16.mxu0 0
    %909 = vmatpush2.bf16.msra.mxu0 0
    %910 = vmatprep.mubr.bf16.mxu0 0
    %911 = vmatmul.mubr.bf16.gmra.mxu0 %v873
    %v912 = vpop.f32.mrf.mxu0
    %v913 = vadd.f32 0.0, %v912
    %v914 = vpop.f32.mrf.mxu0
    %v915 = vpop.f32.mrf.mxu0
    %v916 = vpop.f32.mrf.mxu0
    %917 = vdwg.mxu0
    %v918 = vrcp.pop %v869
    %v919 = vmul.f32 %v913, %v918
    %920 = vrot.lane.b32.xlu0 %v812, 96
    %v921 = vpop.permute.xlu0 %920
    %922 = vrot.lane.b32.xlu0 %v813, 96
    %v923 = vpop.permute.xlu0 %922
    %v925 = vsel %vm351, %v921, 0
    %v928 = vsel %vm351, %v923, 0
    %930 = vmatprep.subr.bf16.mxu0 0
    %931 = vmatpush1.bf16.xpose.msra.mxu0 0
    %932 = vmatprep.subr.bf16.mxu0 0
    %933 = vmatpush1.bf16.xpose.msra.mxu0 0
    %934 = vmatprep.subr.bf16.mxu0 0
    %935 = vmatpush1.bf16.xpose.msra.mxu0 0
    %936 = vmatprep.subr.bf16.mxu0 0
    %937 = vmatpush1.bf16.xpose.msra.mxu0 0
    %938 = vmatprep.subr.bf16.mxu0 0
    %939 = vmatpush1.bf16.xpose.msra.mxu0 0
    %940 = vmatprep.subr.bf16.mxu0 0
    %941 = vmatpush1.bf16.xpose.msra.mxu0 0
    %942 = vmatprep.subr.bf16.mxu0 0
    %943 = vmatpush1.bf16.xpose.msra.mxu0 0
    %944 = vmatprep.subr.bf16.mxu0 0
    %945 = vmatpush1.bf16.xpose.msra.mxu0 %v928
    %946 = vmatprep.subr.bf16.mxu0 0
    %947 = vmatpush2.bf16.xpose.msra.mxu0 0
    %948 = vmatprep.subr.bf16.mxu0 0
    %949 = vmatpush2.bf16.xpose.msra.mxu0 0
    %950 = vmatprep.subr.bf16.mxu0 0
    %951 = vmatpush2.bf16.xpose.msra.mxu0 0
    %952 = vmatprep.subr.bf16.mxu0 0
    %953 = vmatpush2.bf16.xpose.msra.mxu0 0
    %954 = vmatprep.subr.bf16.mxu0 0
    %955 = vmatpush2.bf16.xpose.msra.mxu0 0
    %956 = vmatprep.subr.bf16.mxu0 0
    %957 = vmatpush2.bf16.xpose.msra.mxu0 0
    %958 = vmatprep.subr.bf16.mxu0 0
    %959 = vmatpush2.bf16.xpose.msra.mxu0 0
    %960 = vmatprep.subr.bf16.mxu0 0
    %961 = vmatpush2.bf16.xpose.msra.mxu0 0
    %962 = vmatprep.mubr.bf16.mxu0 0
    %963 = vmatmul.mubr.bf16.gmra.mxu0 %v925
    %v964 = vpop.f32.mrf.mxu0
    %v965 = vadd.f32 0.0, %v964
    %v966 = vpop.f32.mrf.mxu0
    %v967 = vpop.f32.mrf.mxu0
    %v968 = vpop.f32.mrf.mxu0
    %969 = vdwg.mxu0
    %v970 = vsel %vm350, %v965, -1e+10
    %v971 = vsel %vm399, %v970, -inf
    %972 = vmax.xlane.f32.xlu0 %v971
    %v973 = vpop.xlane.xlu0 %972
    %v974 = vsub.f32 %v970, %v973
    %v975 = vmul.f32 %v974, 1.442695
    %v976 = vpow.pop %v975
    %v977 = vsel %vm399, %v976, 0.0
    %978 = vadd.xlane.f32.xlu0 %v977
    %v979 = vpop.xlane.xlu0 %978
    %v980 = vpack.c.bf16 %v976, %v976
    %981 = vrot.lane.b32.xlu0 %v871, 96
    %v982 = vpop.permute.xlu0 %981
    %v984 = vsel %vm399, %v980, 0
    %v987 = vsel %vm413, %v982, 0
    %989 = vmatprep.subr.bf16.mxu0 0
    %990 = vmatpush1.bf16.msra.mxu0 0
    %991 = vmatprep.subr.bf16.mxu0 0
    %992 = vmatpush1.bf16.msra.mxu0 0
    %993 = vmatprep.subr.bf16.mxu0 0
    %994 = vmatpush1.bf16.msra.mxu0 0
    %995 = vmatprep.subr.bf16.mxu0 0
    %996 = vmatpush1.bf16.msra.mxu0 0
    %997 = vmatprep.subr.bf16.mxu0 0
    %998 = vmatpush1.bf16.msra.mxu0 0
    %999 = vmatprep.subr.bf16.mxu0 0
    %1000 = vmatpush1.bf16.msra.mxu0 0
    %1001 = vmatprep.subr.bf16.mxu0 0
    %1002 = vmatpush1.bf16.msra.mxu0 0
    %1003 = vmatprep.subr.bf16.mxu0 0
    %1004 = vmatpush1.bf16.msra.mxu0 %v987
    %1005 = vmatprep.subr.bf16.mxu0 0
    %1006 = vmatpush2.bf16.msra.mxu0 0
    %1007 = vmatprep.subr.bf16.mxu0 0
    %1008 = vmatpush2.bf16.msra.mxu0 0
    %1009 = vmatprep.subr.bf16.mxu0 0
    %1010 = vmatpush2.bf16.msra.mxu0 0
    %1011 = vmatprep.subr.bf16.mxu0 0
    %1012 = vmatpush2.bf16.msra.mxu0 0
    %1013 = vmatprep.subr.bf16.mxu0 0
    %1014 = vmatpush2.bf16.msra.mxu0 0
    %1015 = vmatprep.subr.bf16.mxu0 0
    %1016 = vmatpush2.bf16.msra.mxu0 0
    %1017 = vmatprep.subr.bf16.mxu0 0
    %1018 = vmatpush2.bf16.msra.mxu0 0
    %1019 = vmatprep.subr.bf16.mxu0 0
    %1020 = vmatpush2.bf16.msra.mxu0 0
    %1021 = vmatprep.mubr.bf16.mxu0 0
    %1022 = vmatmul.mubr.bf16.gmra.mxu0 %v984
    %v1023 = vpop.f32.mrf.mxu0
    %v1024 = vadd.f32 0.0, %v1023
    %v1025 = vpop.f32.mrf.mxu0
    %v1026 = vpop.f32.mrf.mxu0
    %v1027 = vpop.f32.mrf.mxu0
    %1028 = vdwg.mxu0
    %v1029 = vrcp.pop %v979
    %v1030 = vmul.f32 %v1024, %v1029
    %1031 = vrot.lane.b32.xlu0 %v812, 64
    %v1032 = vpop.permute.xlu0 %1031
    %1033 = vrot.lane.b32.xlu0 %v813, 64
    %v1034 = vpop.permute.xlu0 %1033
    %v1036 = vsel %vm351, %v1032, 0
    %v1039 = vsel %vm351, %v1034, 0
    %1041 = vmatprep.subr.bf16.mxu0 0
    %1042 = vmatpush1.bf16.xpose.msra.mxu0 0
    %1043 = vmatprep.subr.bf16.mxu0 0
    %1044 = vmatpush1.bf16.xpose.msra.mxu0 0
    %1045 = vmatprep.subr.bf16.mxu0 0
    %1046 = vmatpush1.bf16.xpose.msra.mxu0 0
    %1047 = vmatprep.subr.bf16.mxu0 0
    %1048 = vmatpush1.bf16.xpose.msra.mxu0 0
    %1049 = vmatprep.subr.bf16.mxu0 0
    %1050 = vmatpush1.bf16.xpose.msra.mxu0 0
    %1051 = vmatprep.subr.bf16.mxu0 0
    %1052 = vmatpush1.bf16.xpose.msra.mxu0 0
    %1053 = vmatprep.subr.bf16.mxu0 0
    %1054 = vmatpush1.bf16.xpose.msra.mxu0 0
    %1055 = vmatprep.subr.bf16.mxu0 0
    %1056 = vmatpush1.bf16.xpose.msra.mxu0 %v1039
    %1057 = vmatprep.subr.bf16.mxu0 0
    %1058 = vmatpush2.bf16.xpose.msra.mxu0 0
    %1059 = vmatprep.subr.bf16.mxu0 0
    %1060 = vmatpush2.bf16.xpose.msra.mxu0 0
    %1061 = vmatprep.subr.bf16.mxu0 0
    %1062 = vmatpush2.bf16.xpose.msra.mxu0 0
    %1063 = vmatprep.subr.bf16.mxu0 0
    %1064 = vmatpush2.bf16.xpose.msra.mxu0 0
    %1065 = vmatprep.subr.bf16.mxu0 0
    %1066 = vmatpush2.bf16.xpose.msra.mxu0 0
    %1067 = vmatprep.subr.bf16.mxu0 0
    %1068 = vmatpush2.bf16.xpose.msra.mxu0 0
    %1069 = vmatprep.subr.bf16.mxu0 0
    %1070 = vmatpush2.bf16.xpose.msra.mxu0 0
    %1071 = vmatprep.subr.bf16.mxu0 0
    %1072 = vmatpush2.bf16.xpose.msra.mxu0 0
    %1073 = vmatprep.mubr.bf16.mxu0 0
    %1074 = vmatmul.mubr.bf16.gmra.mxu0 %v1036
    %v1075 = vpop.f32.mrf.mxu0
    %v1076 = vadd.f32 0.0, %v1075
    %v1077 = vpop.f32.mrf.mxu0
    %v1078 = vpop.f32.mrf.mxu0
    %v1079 = vpop.f32.mrf.mxu0
    %1080 = vdwg.mxu0
    %v1081 = vsel %vm350, %v1076, -1e+10
    %v1082 = vsel %vm399, %v1081, -inf
    %1083 = vmax.xlane.f32.xlu0 %v1082
    %v1084 = vpop.xlane.xlu0 %1083
    %v1085 = vsub.f32 %v1081, %v1084
    %v1086 = vmul.f32 %v1085, 1.442695
    %v1087 = vpow.pop %v1086
    %v1088 = vsel %vm399, %v1087, 0.0
    %1089 = vadd.xlane.f32.xlu0 %v1088
    %v1090 = vpop.xlane.xlu0 %1089
    %v1091 = vpack.c.bf16 %v1087, %v1087
    %1092 = vrot.lane.b32.xlu0 %v871, 64
    %v1093 = vpop.permute.xlu0 %1092
    %v1095 = vsel %vm399, %v1091, 0
    %v1098 = vsel %vm413, %v1093, 0
    %1100 = vmatprep.subr.bf16.mxu0 0
    %1101 = vmatpush1.bf16.msra.mxu0 0
    %1102 = vmatprep.subr.bf16.mxu0 0
    %1103 = vmatpush1.bf16.msra.mxu0 0
    %1104 = vmatprep.subr.bf16.mxu0 0
    %1105 = vmatpush1.bf16.msra.mxu0 0
    %1106 = vmatprep.subr.bf16.mxu0 0
    %1107 = vmatpush1.bf16.msra.mxu0 0
    %1108 = vmatprep.subr.bf16.mxu0 0
    %1109 = vmatpush1.bf16.msra.mxu0 0
    %1110 = vmatprep.subr.bf16.mxu0 0
    %1111 = vmatpush1.bf16.msra.mxu0 0
    %1112 = vmatprep.subr.bf16.mxu0 0
    %1113 = vmatpush1.bf16.msra.mxu0 0
    %1114 = vmatprep.subr.bf16.mxu0 0
    %1115 = vmatpush1.bf16.msra.mxu0 %v1098
    %1116 = vmatprep.subr.bf16.mxu0 0
    %1117 = vmatpush2.bf16.msra.mxu0 0
    %1118 = vmatprep.subr.bf16.mxu0 0
    %1119 = vmatpush2.bf16.msra.mxu0 0
    %1120 = vmatprep.subr.bf16.mxu0 0
    %1121 = vmatpush2.bf16.msra.mxu0 0
    %1122 = vmatprep.subr.bf16.mxu0 0
    %1123 = vmatpush2.bf16.msra.mxu0 0
    %1124 = vmatprep.subr.bf16.mxu0 0
    %1125 = vmatpush2.bf16.msra.mxu0 0
    %1126 = vmatprep.subr.bf16.mxu0 0
    %1127 = vmatpush2.bf16.msra.mxu0 0
    %1128 = vmatprep.subr.bf16.mxu0 0
    %1129 = vmatpush2.bf16.msra.mxu0 0
    %1130 = vmatprep.subr.bf16.mxu0 0
    %1131 = vmatpush2.bf16.msra.mxu0 0
    %1132 = vmatprep.mubr.bf16.mxu0 0
    %1133 = vmatmul.mubr.bf16.gmra.mxu0 %v1095
    %v1134 = vpop.f32.mrf.mxu0
    %v1135 = vadd.f32 0.0, %v1134
    %v1136 = vpop.f32.mrf.mxu0
    %v1137 = vpop.f32.mrf.mxu0
    %v1138 = vpop.f32.mrf.mxu0
    %1139 = vdwg.mxu0
    %v1140 = vrcp.pop %v1090
    %v1141 = vmul.f32 %v1135, %v1140
    %1142 = vrot.lane.b32.xlu0 %v812, 32
    %v1143 = vpop.permute.xlu0 %1142
    %1144 = vrot.lane.b32.xlu0 %v813, 32
    %v1145 = vpop.permute.xlu0 %1144
    %v1147 = vsel %vm351, %v1143, 0
    %v1150 = vsel %vm351, %v1145, 0
    %1152 = vmatprep.subr.bf16.mxu0 0
    %1153 = vmatpush1.bf16.xpose.msra.mxu0 0
    %1154 = vmatprep.subr.bf16.mxu0 0
    %1155 = vmatpush1.bf16.xpose.msra.mxu0 0
    %1156 = vmatprep.subr.bf16.mxu0 0
    %1157 = vmatpush1.bf16.xpose.msra.mxu0 0
    %1158 = vmatprep.subr.bf16.mxu0 0
    %1159 = vmatpush1.bf16.xpose.msra.mxu0 0
    %1160 = vmatprep.subr.bf16.mxu0 0
    %1161 = vmatpush1.bf16.xpose.msra.mxu0 0
    %1162 = vmatprep.subr.bf16.mxu0 0
    %1163 = vmatpush1.bf16.xpose.msra.mxu0 0
    %1164 = vmatprep.subr.bf16.mxu0 0
    %1165 = vmatpush1.bf16.xpose.msra.mxu0 0
    %1166 = vmatprep.subr.bf16.mxu0 0
    %1167 = vmatpush1.bf16.xpose.msra.mxu0 %v1150
    %1168 = vmatprep.subr.bf16.mxu0 0
    %1169 = vmatpush2.bf16.xpose.msra.mxu0 0
    %1170 = vmatprep.subr.bf16.mxu0 0
    %1171 = vmatpush2.bf16.xpose.msra.mxu0 0
    %1172 = vmatprep.subr.bf16.mxu0 0
    %1173 = vmatpush2.bf16.xpose.msra.mxu0 0
    %1174 = vmatprep.subr.bf16.mxu0 0
    %1175 = vmatpush2.bf16.xpose.msra.mxu0 0
    %1176 = vmatprep.subr.bf16.mxu0 0
    %1177 = vmatpush2.bf16.xpose.msra.mxu0 0
    %1178 = vmatprep.subr.bf16.mxu0 0
    %1179 = vmatpush2.bf16.xpose.msra.mxu0 0
    %1180 = vmatprep.subr.bf16.mxu0 0
    %1181 = vmatpush2.bf16.xpose.msra.mxu0 0
    %1182 = vmatprep.subr.bf16.mxu0 0
    %1183 = vmatpush2.bf16.xpose.msra.mxu0 0
    %1184 = vmatprep.mubr.bf16.mxu0 0
    %1185 = vmatmul.mubr.bf16.gmra.mxu0 %v1147
    %v1186 = vpop.f32.mrf.mxu0
    %v1187 = vadd.f32 0.0, %v1186
    %v1188 = vpop.f32.mrf.mxu0
    %v1189 = vpop.f32.mrf.mxu0
    %v1190 = vpop.f32.mrf.mxu0
    %1191 = vdwg.mxu0
    %v1192 = vsel %vm350, %v1187, -1e+10
    %v1193 = vsel %vm399, %v1192, -inf
    %1194 = vmax.xlane.f32.xlu0 %v1193
    %v1195 = vpop.xlane.xlu0 %1194
    %v1196 = vsub.f32 %v1192, %v1195
    %v1197 = vmul.f32 %v1196, 1.442695
    %v1198 = vpow.pop %v1197
    %v1199 = vsel %vm399, %v1198, 0.0
    %1200 = vadd.xlane.f32.xlu0 %v1199
    %v1201 = vpop.xlane.xlu0 %1200
    %v1202 = vpack.c.bf16 %v1198, %v1198
    %1203 = vrot.lane.b32.xlu0 %v871, 32
    %v1204 = vpop.permute.xlu0 %1203
    %v1206 = vsel %vm399, %v1202, 0
    %v1209 = vsel %vm413, %v1204, 0
    %1211 = vmatprep.subr.bf16.mxu0 0
    %1212 = vmatpush1.bf16.msra.mxu0 0
    %1213 = vmatprep.subr.bf16.mxu0 0
    %1214 = vmatpush1.bf16.msra.mxu0 0
    %1215 = vmatprep.subr.bf16.mxu0 0
    %1216 = vmatpush1.bf16.msra.mxu0 0
    %1217 = vmatprep.subr.bf16.mxu0 0
    %1218 = vmatpush1.bf16.msra.mxu0 0
    %1219 = vmatprep.subr.bf16.mxu0 0
    %1220 = vmatpush1.bf16.msra.mxu0 0
    %1221 = vmatprep.subr.bf16.mxu0 0
    %1222 = vmatpush1.bf16.msra.mxu0 0
    %1223 = vmatprep.subr.bf16.mxu0 0
    %1224 = vmatpush1.bf16.msra.mxu0 0
    %1225 = vmatprep.subr.bf16.mxu0 0
    %1226 = vmatpush1.bf16.msra.mxu0 %v1209
    %1227 = vmatprep.subr.bf16.mxu0 0
    %1228 = vmatpush2.bf16.msra.mxu0 0
    %1229 = vmatprep.subr.bf16.mxu0 0
    %1230 = vmatpush2.bf16.msra.mxu0 0
    %1231 = vmatprep.subr.bf16.mxu0 0
    %1232 = vmatpush2.bf16.msra.mxu0 0
    %1233 = vmatprep.subr.bf16.mxu0 0
    %1234 = vmatpush2.bf16.msra.mxu0 0
    %1235 = vmatprep.subr.bf16.mxu0 0
    %1236 = vmatpush2.bf16.msra.mxu0 0
    %1237 = vmatprep.subr.bf16.mxu0 0
    %1238 = vmatpush2.bf16.msra.mxu0 0
    %1239 = vmatprep.subr.bf16.mxu0 0
    %1240 = vmatpush2.bf16.msra.mxu0 0
    %1241 = vmatprep.subr.bf16.mxu0 0
    %1242 = vmatpush2.bf16.msra.mxu0 0
    %1243 = vmatprep.mubr.bf16.mxu0 0
    %1244 = vmatmul.mubr.bf16.gmra.mxu0 %v1206
    %v1245 = vpop.f32.mrf.mxu0
    %v1246 = vadd.f32 0.0, %v1245
    %v1247 = vpop.f32.mrf.mxu0
    %v1248 = vpop.f32.mrf.mxu0
    %v1249 = vpop.f32.mrf.mxu0
    %1250 = vdwg.mxu0
    %v1251 = vrcp.pop %v1201
    %v1252 = vmul.f32 %v1246, %v1251
    %1254 = vrot.lane.b32.xlu0 %v1030, 32
    %v1255 = vpop.permute.xlu0 %1254
    %1258 = vrot.lane.b32.xlu0 %v1141, 64
    %v1259 = vpop.permute.xlu0 %1258
    %1262 = vrot.lane.b32.xlu0 %v1252, 96
    %v1263 = vpop.permute.xlu0 %1262
    %v1265 = vsel %vm351, %v919, %v1255
    %v1266 = vsel %vm808, %v1265, %v1259
    %v1267 = vsel %vm810, %v1266, %v1263
    %v1268 = vpack.c.bf16 %v1267, %v811
    %v1269 = vld [vmem:[#allocation7] sm:$0xf]
    %v1270 = vld [vmem:[#allocation7 + $0x4] sm:$0xf]
    %v1271 = vld [vmem:[#allocation7 + $0x8] sm:$0xf]
    %v1272 = vld [vmem:[#allocation7 + $0xc] sm:$0xf]
    %v1273 = vld [vmem:[#allocation7 + $0x10] sm:$0xf]
    %v1274 = vld [vmem:[#allocation7 + $0x14] sm:$0xf]
    %v1275 = vld [vmem:[#allocation7 + $0x18] sm:$0xf]
    %v1276 = vld [vmem:[#allocation7 + $0x1c] sm:$0xf]
    %v1277 = vld [vmem:[#allocation7 + $0x20] sm:$0xf]
    %v1278 = vld [vmem:[#allocation7 + $0x24] sm:$0xf]
    %v1279 = vld [vmem:[#allocation7 + $0x28] sm:$0xf]
    %v1280 = vld [vmem:[#allocation7 + $0x2c] sm:$0xf]
    %v1281 = vld [vmem:[#allocation7 + $0x30] sm:$0xf]
    %v1282 = vld [vmem:[#allocation7 + $0x34] sm:$0xf]
    %v1283 = vld [vmem:[#allocation7 + $0x38] sm:$0xf]
    %v1284 = vld [vmem:[#allocation7 + $0x3c] sm:$0xf]
    %v1301 = vunpack.c.l.b16 %v1269
    %v1302 = vunpack.c.l.b16 %v1270
    %v1303 = vunpack.c.l.b16 %v1271
    %v1304 = vunpack.c.l.b16 %v1272
    %v1305 = vunpack.c.l.b16 %v1273
    %v1306 = vunpack.c.l.b16 %v1274
    %v1307 = vunpack.c.l.b16 %v1275
    %v1308 = vunpack.c.l.b16 %v1276
    %v1309 = vunpack.c.l.b16 %v1277
    %v1310 = vunpack.c.l.b16 %v1278
    %v1311 = vunpack.c.l.b16 %v1279
    %v1312 = vunpack.c.l.b16 %v1280
    %v1313 = vunpack.c.l.b16 %v1281
    %v1314 = vunpack.c.l.b16 %v1282
    %v1315 = vunpack.c.l.b16 %v1283
    %v1316 = vunpack.c.l.b16 %v1284
    %v1317 = vpack.c.b16 %v1302, %v1301
    %v1318 = vpack.c.b16 %v1304, %v1303
    %v1319 = vpack.c.b16 %v1306, %v1305
    %v1320 = vpack.c.b16 %v1308, %v1307
    %v1321 = vpack.c.b16 %v1310, %v1309
    %v1322 = vpack.c.b16 %v1312, %v1311
    %v1323 = vpack.c.b16 %v1314, %v1313
    %v1324 = vpack.c.b16 %v1316, %v1315
    %1333 = vmatprep.subr.bf16.mxu0 0
    %1334 = vmatpush1.bf16.msra.mxu0 %v1324
    %1335 = vmatprep.subr.bf16.mxu0 0
    %1336 = vmatpush1.bf16.msra.mxu0 %v1323
    %1337 = vmatprep.subr.bf16.mxu0 0
    %1338 = vmatpush1.bf16.msra.mxu0 %v1322
    %1339 = vmatprep.subr.bf16.mxu0 0
    %1340 = vmatpush1.bf16.msra.mxu0 %v1321
    %1341 = vmatprep.subr.bf16.mxu0 0
    %1342 = vmatpush1.bf16.msra.mxu0 %v1320
    %1343 = vmatprep.subr.bf16.mxu0 0
    %1344 = vmatpush1.bf16.msra.mxu0 %v1319
    %1345 = vmatprep.subr.bf16.mxu0 0
    %1346 = vmatpush1.bf16.msra.mxu0 %v1318
    %1347 = vmatprep.subr.bf16.mxu0 0
    %1348 = vmatpush1.bf16.msra.mxu0 %v1317
    %1349 = vmatprep.subr.bf16.mxu0 0
    %1350 = vmatpush2.bf16.msra.mxu0 0
    %1351 = vmatprep.subr.bf16.mxu0 0
    %1352 = vmatpush2.bf16.msra.mxu0 0
    %1353 = vmatprep.subr.bf16.mxu0 0
    %1354 = vmatpush2.bf16.msra.mxu0 0
    %1355 = vmatprep.subr.bf16.mxu0 0
    %1356 = vmatpush2.bf16.msra.mxu0 0
    %1357 = vmatprep.subr.bf16.mxu0 0
    %1358 = vmatpush2.bf16.msra.mxu0 0
    %1359 = vmatprep.subr.bf16.mxu0 0
    %1360 = vmatpush2.bf16.msra.mxu0 0
    %1361 = vmatprep.subr.bf16.mxu0 0
    %1362 = vmatpush2.bf16.msra.mxu0 0
    %1363 = vmatprep.subr.bf16.mxu0 0
    %1364 = vmatpush2.bf16.msra.mxu0 0
    %1365 = vmatprep.mubr.bf16.mxu0 0
    %1366 = vmatmul.mubr.bf16.gmra.mxu0 %v1268
    %v1367 = vpop.f32.mrf.mxu0
    %v1368 = vadd.f32 0.0, %v1367
    %v1369 = vpop.f32.mrf.mxu0
    %v1370 = vpop.f32.mrf.mxu0
    %v1371 = vadd.f32 0.0, %v1370
    %v1372 = vpop.f32.mrf.mxu0
    %1373 = vdwg.mxu0
    %v1374 = vadd.f32 %v96, %v1368
    %v1375 = vadd.f32 %v97, %v1371
    %v1376 = vpack.c.bf16 %v1375, %v1374
    %v1377 = vld [vmem:[#allocation8] sm:$0xff]
    %v1378 = vld [vmem:[#allocation8 + $0x8] sm:$0xff]
    %v1379 = vld [vmem:[#allocation8 + $0x10] sm:$0xff]
    %v1380 = vld [vmem:[#allocation8 + $0x18] sm:$0xff]
    %v1381 = vld [vmem:[#allocation8 + $0x20] sm:$0xff]
    %v1382 = vld [vmem:[#allocation8 + $0x28] sm:$0xff]
    %v1383 = vld [vmem:[#allocation8 + $0x30] sm:$0xff]
    %v1384 = vld [vmem:[#allocation8 + $0x38] sm:$0xff]
    %v1385 = vld [vmem:[#allocation8 + $0x40] sm:$0xff]
    %v1386 = vld [vmem:[#allocation8 + $0x48] sm:$0xff]
    %v1387 = vld [vmem:[#allocation8 + $0x50] sm:$0xff]
    %v1388 = vld [vmem:[#allocation8 + $0x58] sm:$0xff]
    %v1389 = vld [vmem:[#allocation8 + $0x60] sm:$0xff]
    %v1390 = vld [vmem:[#allocation8 + $0x68] sm:$0xff]
    %v1391 = vld [vmem:[#allocation8 + $0x70] sm:$0xff]
    %v1392 = vld [vmem:[#allocation8 + $0x78] sm:$0xff]
    %v1393 = vld [vmem:[#allocation8 + $0x80] sm:$0xff]
    %v1394 = vld [vmem:[#allocation8 + $0x88] sm:$0xff]
    %v1395 = vld [vmem:[#allocation8 + $0x90] sm:$0xff]
    %v1396 = vld [vmem:[#allocation8 + $0x98] sm:$0xff]
    %v1397 = vld [vmem:[#allocation8 + $0xa0] sm:$0xff]
    %v1398 = vld [vmem:[#allocation8 + $0xa8] sm:$0xff]
    %v1399 = vld [vmem:[#allocation8 + $0xb0] sm:$0xff]
    %v1400 = vld [vmem:[#allocation8 + $0xb8] sm:$0xff]
    %v1401 = vld [vmem:[#allocation8 + $0xc0] sm:$0xff]
    %v1402 = vld [vmem:[#allocation8 + $0xc8] sm:$0xff]
    %v1403 = vld [vmem:[#allocation8 + $0xd0] sm:$0xff]
    %v1404 = vld [vmem:[#allocation8 + $0xd8] sm:$0xff]
    %v1405 = vld [vmem:[#allocation8 + $0xe0] sm:$0xff]
    %v1406 = vld [vmem:[#allocation8 + $0xe8] sm:$0xff]
    %v1407 = vld [vmem:[#allocation8 + $0xf0] sm:$0xff]
    %v1408 = vld [vmem:[#allocation8 + $0xf8] sm:$0xff]
    %v1409 = vld [vmem:[%s4] sm:$0xf]
    %v1411 = vlaneseq
    %v1412 = vshrl.u32 %v1411, 7
    %v1413 = vsub.s32 0, %v1412
    %v1414 = vrot.slane %v1409, %v1413
    %v1415 = vlaneseq
    %v1416 = vshrl.u32 %v1415, 7
    %v1417 = vsub.s32 1, %v1416
    %v1418 = vrot.slane %v1409, %v1417
    %v1419 = vlaneseq
    %v1420 = vshrl.u32 %v1419, 7
    %v1421 = vsub.s32 2, %v1420
    %v1422 = vrot.slane %v1409, %v1421
    %v1423 = vlaneseq
    %v1424 = vshrl.u32 %v1423, 7
    %v1425 = vsub.s32 3, %v1424
    %v1426 = vrot.slane %v1409, %v1425
    %v1463 = vunpack.c.l.b16 %v1377
    %v1464 = vunpack.c.h.b16 %v1377
    %v1465 = vunpack.c.l.b16 %v1378
    %v1466 = vunpack.c.h.b16 %v1378
    %v1467 = vunpack.c.l.b16 %v1379
    %v1468 = vunpack.c.h.b16 %v1379
    %v1469 = vunpack.c.l.b16 %v1380
    %v1470 = vunpack.c.h.b16 %v1380
    %v1471 = vunpack.c.l.b16 %v1381
    %v1472 = vunpack.c.h.b16 %v1381
    %v1473 = vunpack.c.l.b16 %v1382
    %v1474 = vunpack.c.h.b16 %v1382
    %v1475 = vunpack.c.l.b16 %v1383
    %v1476 = vunpack.c.h.b16 %v1383
    %v1477 = vunpack.c.l.b16 %v1384
    %v1478 = vunpack.c.h.b16 %v1384
    %v1479 = vunpack.c.l.b16 %v1385
    %v1480 = vunpack.c.h.b16 %v1385
    %v1481 = vunpack.c.l.b16 %v1386
    %v1482 = vunpack.c.h.b16 %v1386
    %v1483 = vunpack.c.l.b16 %v1387
    %v1484 = vunpack.c.h.b16 %v1387
    %v1485 = vunpack.c.l.b16 %v1388
    %v1486 = vunpack.c.h.b16 %v1388
    %v1487 = vunpack.c.l.b16 %v1389
    %v1488 = vunpack.c.h.b16 %v1389
    %v1489 = vunpack.c.l.b16 %v1390
    %v1490 = vunpack.c.h.b16 %v1390
    %v1491 = vunpack.c.l.b16 %v1391
    %v1492 = vunpack.c.h.b16 %v1391
    %v1493 = vunpack.c.l.b16 %v1392
    %v1494 = vunpack.c.h.b16 %v1392
    %v1495 = vunpack.c.l.b16 %v1393
    %v1496 = vunpack.c.h.b16 %v1393
    %v1497 = vunpack.c.l.b16 %v1394
    %v1498 = vunpack.c.h.b16 %v1394
    %v1499 = vunpack.c.l.b16 %v1395
    %v1500 = vunpack.c.h.b16 %v1395
    %v1501 = vunpack.c.l.b16 %v1396
    %v1502 = vunpack.c.h.b16 %v1396
    %v1503 = vunpack.c.l.b16 %v1397
    %v1504 = vunpack.c.h.b16 %v1397
    %v1505 = vunpack.c.l.b16 %v1398
    %v1506 = vunpack.c.h.b16 %v1398
    %v1507 = vunpack.c.l.b16 %v1399
    %v1508 = vunpack.c.h.b16 %v1399
    %v1509 = vunpack.c.l.b16 %v1400
    %v1510 = vunpack.c.h.b16 %v1400
    %v1511 = vunpack.c.l.b16 %v1401
    %v1512 = vunpack.c.h.b16 %v1401
    %v1513 = vunpack.c.l.b16 %v1402
    %v1514 = vunpack.c.h.b16 %v1402
    %v1515 = vunpack.c.l.b16 %v1403
    %v1516 = vunpack.c.h.b16 %v1403
    %v1517 = vunpack.c.l.b16 %v1404
    %v1518 = vunpack.c.h.b16 %v1404
    %v1519 = vunpack.c.l.b16 %v1405
    %v1520 = vunpack.c.h.b16 %v1405
    %v1521 = vunpack.c.l.b16 %v1406
    %v1522 = vunpack.c.h.b16 %v1406
    %v1523 = vunpack.c.l.b16 %v1407
    %v1524 = vunpack.c.h.b16 %v1407
    %v1525 = vunpack.c.l.b16 %v1408
    %v1526 = vunpack.c.h.b16 %v1408
    %v1527 = vpack.c.b16 %v1467, %v1463
    %v1528 = vpack.c.b16 %v1468, %v1464
    %v1529 = vpack.c.b16 %v1469, %v1465
    %v1530 = vpack.c.b16 %v1470, %v1466
    %v1531 = vpack.c.b16 %v1475, %v1471
    %v1532 = vpack.c.b16 %v1476, %v1472
    %v1533 = vpack.c.b16 %v1477, %v1473
    %v1534 = vpack.c.b16 %v1478, %v1474
    %v1535 = vpack.c.b16 %v1483, %v1479
    %v1536 = vpack.c.b16 %v1484, %v1480
    %v1537 = vpack.c.b16 %v1485, %v1481
    %v1538 = vpack.c.b16 %v1486, %v1482
    %v1539 = vpack.c.b16 %v1491, %v1487
    %v1540 = vpack.c.b16 %v1492, %v1488
    %v1541 = vpack.c.b16 %v1493, %v1489
    %v1542 = vpack.c.b16 %v1494, %v1490
    %v1543 = vpack.c.b16 %v1499, %v1495
    %v1544 = vpack.c.b16 %v1500, %v1496
    %v1545 = vpack.c.b16 %v1501, %v1497
    %v1546 = vpack.c.b16 %v1502, %v1498
    %v1547 = vpack.c.b16 %v1507, %v1503
    %v1548 = vpack.c.b16 %v1508, %v1504
    %v1549 = vpack.c.b16 %v1509, %v1505
    %v1550 = vpack.c.b16 %v1510, %v1506
    %v1551 = vpack.c.b16 %v1515, %v1511
    %v1552 = vpack.c.b16 %v1516, %v1512
    %v1553 = vpack.c.b16 %v1517, %v1513
    %v1554 = vpack.c.b16 %v1518, %v1514
    %v1555 = vpack.c.b16 %v1523, %v1519
    %v1556 = vpack.c.b16 %v1524, %v1520
    %v1557 = vpack.c.b16 %v1525, %v1521
    %v1558 = vpack.c.b16 %v1526, %v1522
    %1591 = vmatprep.subr.bf16.mxu0 %v1556
    %1592 = vmatpush1.bf16.msra.mxu0 %v1555
    %1593 = vmatprep.subr.bf16.mxu0 %v1552
    %1594 = vmatpush1.bf16.msra.mxu0 %v1551
    %1595 = vmatprep.subr.bf16.mxu0 %v1548
    %1596 = vmatpush1.bf16.msra.mxu0 %v1547
    %1597 = vmatprep.subr.bf16.mxu0 %v1544
    %1598 = vmatpush1.bf16.msra.mxu0 %v1543
    %1599 = vmatprep.subr.bf16.mxu0 %v1540
    %1600 = vmatpush1.bf16.msra.mxu0 %v1539
    %1601 = vmatprep.subr.bf16.mxu0 %v1536
    %1602 = vmatpush1.bf16.msra.mxu0 %v1535
    %1603 = vmatprep.subr.bf16.mxu0 %v1532
    %1604 = vmatpush1.bf16.msra.mxu0 %v1531
    %1605 = vmatprep.subr.bf16.mxu0 %v1528
    %1606 = vmatpush1.bf16.msra.mxu0 %v1527
    %1607 = vmatprep.subr.bf16.mxu0 0
    %1608 = vmatpush2.bf16.msra.mxu0 0
    %1609 = vmatprep.subr.bf16.mxu0 0
    %1610 = vmatpush2.bf16.msra.mxu0 0
    %1611 = vmatprep.subr.bf16.mxu0 0
    %1612 = vmatpush2.bf16.msra.mxu0 0
    %1613 = vmatprep.subr.bf16.mxu0 0
    %1614 = vmatpush2.bf16.msra.mxu0 0
    %1615 = vmatprep.subr.bf16.mxu0 0
    %1616 = vmatpush2.bf16.msra.mxu0 0
    %1617 = vmatprep.subr.bf16.mxu0 0
    %1618 = vmatpush2.bf16.msra.mxu0 0
    %1619 = vmatprep.subr.bf16.mxu0 0
    %1620 = vmatpush2.bf16.msra.mxu0 0
    %1621 = vmatprep.subr.bf16.mxu0 0
    %1622 = vmatpush2.bf16.msra.mxu0 0
    %1623 = vmatprep.mubr.bf16.mxu0 0
    %1624 = vmatmul.mubr.bf16.gmra.mxu0 %v1376
    %v1625 = vpop.f32.mrf.mxu0
    %v1626 = vadd.f32 %v1414, %v1625
    %v1627 = vpop.f32.mrf.mxu0
    %v1628 = vadd.f32 %v1418, %v1627
    %v1629 = vpop.f32.mrf.mxu0
    %v1630 = vadd.f32 %v1414, %v1629
    %v1631 = vpop.f32.mrf.mxu0
    %v1632 = vadd.f32 %v1418, %v1631
    %1633 = vdwg.mxu0
    %1634 = vmatprep.subr.bf16.mxu0 %v1558
    %1635 = vmatpush1.bf16.msra.mxu0 %v1557
    %1636 = vmatprep.subr.bf16.mxu0 %v1554
    %1637 = vmatpush1.bf16.msra.mxu0 %v1553
    %1638 = vmatprep.subr.bf16.mxu0 %v1550
    %1639 = vmatpush1.bf16.msra.mxu0 %v1549
    %1640 = vmatprep.subr.bf16.mxu0 %v1546
    %1641 = vmatpush1.bf16.msra.mxu0 %v1545
    %1642 = vmatprep.subr.bf16.mxu0 %v1542
    %1643 = vmatpush1.bf16.msra.mxu0 %v1541
    %1644 = vmatprep.subr.bf16.mxu0 %v1538
    %1645 = vmatpush1.bf16.msra.mxu0 %v1537
    %1646 = vmatprep.subr.bf16.mxu0 %v1534
    %1647 = vmatpush1.bf16.msra.mxu0 %v1533
    %1648 = vmatprep.subr.bf16.mxu0 %v1530
    %1649 = vmatpush1.bf16.msra.mxu0 %v1529
    %1650 = vmatprep.subr.bf16.mxu0 0
    %1651 = vmatpush2.bf16.msra.mxu0 0
    %1652 = vmatprep.subr.bf16.mxu0 0
    %1653 = vmatpush2.bf16.msra.mxu0 0
    %1654 = vmatprep.subr.bf16.mxu0 0
    %1655 = vmatpush2.bf16.msra.mxu0 0
    %1656 = vmatprep.subr.bf16.mxu0 0
    %1657 = vmatpush2.bf16.msra.mxu0 0
    %1658 = vmatprep.subr.bf16.mxu0 0
    %1659 = vmatpush2.bf16.msra.mxu0 0
    %1660 = vmatprep.subr.bf16.mxu0 0
    %1661 = vmatpush2.bf16.msra.mxu0 0
    %1662 = vmatprep.subr.bf16.mxu0 0
    %1663 = vmatpush2.bf16.msra.mxu0 0
    %1664 = vmatprep.subr.bf16.mxu0 0
    %1665 = vmatpush2.bf16.msra.mxu0 0
    %1666 = vmatprep.mubr.bf16.mxu0 0
    %1667 = vmatmul.mubr.bf16.gmra.mxu0 %v1376
    %v1668 = vpop.f32.mrf.mxu0
    %v1669 = vadd.f32 %v1422, %v1668
    %v1670 = vpop.f32.mrf.mxu0
    %v1671 = vadd.f32 %v1426, %v1670
    %v1672 = vpop.f32.mrf.mxu0
    %v1673 = vadd.f32 %v1422, %v1672
    %v1674 = vpop.f32.mrf.mxu0
    %v1675 = vadd.f32 %v1426, %v1674
    %1676 = vdwg.mxu0
    %v1677 = vmax.f32 %v1626, 0.0
    %v1678 = vmax.f32 %v1628, 0.0
    %v1679 = vmax.f32 %v1669, 0.0
    %v1680 = vmax.f32 %v1671, 0.0
    %v1681 = vmax.f32 %v1630, 0.0
    %v1682 = vmax.f32 %v1632, 0.0
    %v1683 = vmax.f32 %v1673, 0.0
    %v1684 = vmax.f32 %v1675, 0.0
    %v1685 = vpack.c.bf16 %v1681, %v1677
    %v1686 = vpack.c.bf16 %v1682, %v1678
    %v1687 = vpack.c.bf16 %v1683, %v1679
    %v1688 = vpack.c.bf16 %v1684, %v1680
    %v1689 = vld [vmem:[#allocation10] sm:$0xf]
    %v1690 = vld [vmem:[#allocation10 + $0x4] sm:$0xf]
    %v1691 = vld [vmem:[#allocation10 + $0x8] sm:$0xf]
    %v1692 = vld [vmem:[#allocation10 + $0xc] sm:$0xf]
    %v1693 = vld [vmem:[#allocation10 + $0x10] sm:$0xf]
    %v1694 = vld [vmem:[#allocation10 + $0x14] sm:$0xf]
    %v1695 = vld [vmem:[#allocation10 + $0x18] sm:$0xf]
    %v1696 = vld [vmem:[#allocation10 + $0x1c] sm:$0xf]
    %v1697 = vld [vmem:[#allocation10 + $0x20] sm:$0xf]
    %v1698 = vld [vmem:[#allocation10 + $0x24] sm:$0xf]
    %v1699 = vld [vmem:[#allocation10 + $0x28] sm:$0xf]
    %v1700 = vld [vmem:[#allocation10 + $0x2c] sm:$0xf]
    %v1701 = vld [vmem:[#allocation10 + $0x30] sm:$0xf]
    %v1702 = vld [vmem:[#allocation10 + $0x34] sm:$0xf]
    %v1703 = vld [vmem:[#allocation10 + $0x38] sm:$0xf]
    %v1704 = vld [vmem:[#allocation10 + $0x3c] sm:$0xf]
    %v1705 = vld [vmem:[#allocation10 + $0x40] sm:$0xf]
    %v1706 = vld [vmem:[#allocation10 + $0x44] sm:$0xf]
    %v1707 = vld [vmem:[#allocation10 + $0x48] sm:$0xf]
    %v1708 = vld [vmem:[#allocation10 + $0x4c] sm:$0xf]
    %v1709 = vld [vmem:[#allocation10 + $0x50] sm:$0xf]
    %v1710 = vld [vmem:[#allocation10 + $0x54] sm:$0xf]
    %v1711 = vld [vmem:[#allocation10 + $0x58] sm:$0xf]
    %v1712 = vld [vmem:[#allocation10 + $0x5c] sm:$0xf]
    %v1713 = vld [vmem:[#allocation10 + $0x60] sm:$0xf]
    %v1714 = vld [vmem:[#allocation10 + $0x64] sm:$0xf]
    %v1715 = vld [vmem:[#allocation10 + $0x68] sm:$0xf]
    %v1716 = vld [vmem:[#allocation10 + $0x6c] sm:$0xf]
    %v1717 = vld [vmem:[#allocation10 + $0x70] sm:$0xf]
    %v1718 = vld [vmem:[#allocation10 + $0x74] sm:$0xf]
    %v1719 = vld [vmem:[#allocation10 + $0x78] sm:$0xf]
    %v1720 = vld [vmem:[#allocation10 + $0x7c] sm:$0xf]
    %v1721 = vld [vmem:[#allocation10 + $0x80] sm:$0xf]
    %v1722 = vld [vmem:[#allocation10 + $0x84] sm:$0xf]
    %v1723 = vld [vmem:[#allocation10 + $0x88] sm:$0xf]
    %v1724 = vld [vmem:[#allocation10 + $0x8c] sm:$0xf]
    %v1725 = vld [vmem:[#allocation10 + $0x90] sm:$0xf]
    %v1726 = vld [vmem:[#allocation10 + $0x94] sm:$0xf]
    %v1727 = vld [vmem:[#allocation10 + $0x98] sm:$0xf]
    %v1728 = vld [vmem:[#allocation10 + $0x9c] sm:$0xf]
    %v1729 = vld [vmem:[#allocation10 + $0xa0] sm:$0xf]
    %v1730 = vld [vmem:[#allocation10 + $0xa4] sm:$0xf]
    %v1731 = vld [vmem:[#allocation10 + $0xa8] sm:$0xf]
    %v1732 = vld [vmem:[#allocation10 + $0xac] sm:$0xf]
    %v1733 = vld [vmem:[#allocation10 + $0xb0] sm:$0xf]
    %v1734 = vld [vmem:[#allocation10 + $0xb4] sm:$0xf]
    %v1735 = vld [vmem:[#allocation10 + $0xb8] sm:$0xf]
    %v1736 = vld [vmem:[#allocation10 + $0xbc] sm:$0xf]
    %v1737 = vld [vmem:[#allocation10 + $0xc0] sm:$0xf]
    %v1738 = vld [vmem:[#allocation10 + $0xc4] sm:$0xf]
    %v1739 = vld [vmem:[#allocation10 + $0xc8] sm:$0xf]
    %v1740 = vld [vmem:[#allocation10 + $0xcc] sm:$0xf]
    %v1741 = vld [vmem:[#allocation10 + $0xd0] sm:$0xf]
    %v1742 = vld [vmem:[#allocation10 + $0xd4] sm:$0xf]
    %v1743 = vld [vmem:[#allocation10 + $0xd8] sm:$0xf]
    %v1744 = vld [vmem:[#allocation10 + $0xdc] sm:$0xf]
    %v1745 = vld [vmem:[#allocation10 + $0xe0] sm:$0xf]
    %v1746 = vld [vmem:[#allocation10 + $0xe4] sm:$0xf]
    %v1747 = vld [vmem:[#allocation10 + $0xe8] sm:$0xf]
    %v1748 = vld [vmem:[#allocation10 + $0xec] sm:$0xf]
    %v1749 = vld [vmem:[#allocation10 + $0xf0] sm:$0xf]
    %v1750 = vld [vmem:[#allocation10 + $0xf4] sm:$0xf]
    %v1751 = vld [vmem:[#allocation10 + $0xf8] sm:$0xf]
    %v1752 = vld [vmem:[#allocation10 + $0xfc] sm:$0xf]
    %v1753 = vld [vmem:[%s6] sm:$0x1]
    %v1755 = vlaneseq
    %v1756 = vshrl.u32 %v1755, 7
    %v1757 = vsub.s32 0, %v1756
    %v1758 = vrot.slane %v1753, %v1757
    %v1824 = vunpack.c.l.b16 %v1689
    %v1825 = vunpack.c.l.b16 %v1690
    %v1826 = vunpack.c.l.b16 %v1691
    %v1827 = vunpack.c.l.b16 %v1692
    %v1828 = vunpack.c.l.b16 %v1693
    %v1829 = vunpack.c.l.b16 %v1694
    %v1830 = vunpack.c.l.b16 %v1695
    %v1831 = vunpack.c.l.b16 %v1696
    %v1832 = vunpack.c.l.b16 %v1697
    %v1833 = vunpack.c.l.b16 %v1698
    %v1834 = vunpack.c.l.b16 %v1699
    %v1835 = vunpack.c.l.b16 %v1700
    %v1836 = vunpack.c.l.b16 %v1701
    %v1837 = vunpack.c.l.b16 %v1702
    %v1838 = vunpack.c.l.b16 %v1703
    %v1839 = vunpack.c.l.b16 %v1704
    %v1840 = vunpack.c.l.b16 %v1705
    %v1841 = vunpack.c.l.b16 %v1706
    %v1842 = vunpack.c.l.b16 %v1707
    %v1843 = vunpack.c.l.b16 %v1708
    %v1844 = vunpack.c.l.b16 %v1709
    %v1845 = vunpack.c.l.b16 %v1710
    %v1846 = vunpack.c.l.b16 %v1711
    %v1847 = vunpack.c.l.b16 %v1712
    %v1848 = vunpack.c.l.b16 %v1713
    %v1849 = vunpack.c.l.b16 %v1714
    %v1850 = vunpack.c.l.b16 %v1715
    %v1851 = vunpack.c.l.b16 %v1716
    %v1852 = vunpack.c.l.b16 %v1717
    %v1853 = vunpack.c.l.b16 %v1718
    %v1854 = vunpack.c.l.b16 %v1719
    %v1855 = vunpack.c.l.b16 %v1720
    %v1856 = vunpack.c.l.b16 %v1721
    %v1857 = vunpack.c.l.b16 %v1722
    %v1858 = vunpack.c.l.b16 %v1723
    %v1859 = vunpack.c.l.b16 %v1724
    %v1860 = vunpack.c.l.b16 %v1725
    %v1861 = vunpack.c.l.b16 %v1726
    %v1862 = vunpack.c.l.b16 %v1727
    %v1863 = vunpack.c.l.b16 %v1728
    %v1864 = vunpack.c.l.b16 %v1729
    %v1865 = vunpack.c.l.b16 %v1730
    %v1866 = vunpack.c.l.b16 %v1731
    %v1867 = vunpack.c.l.b16 %v1732
    %v1868 = vunpack.c.l.b16 %v1733
    %v1869 = vunpack.c.l.b16 %v1734
    %v1870 = vunpack.c.l.b16 %v1735
    %v1871 = vunpack.c.l.b16 %v1736
    %v1872 = vunpack.c.l.b16 %v1737
    %v1873 = vunpack.c.l.b16 %v1738
    %v1874 = vunpack.c.l.b16 %v1739
    %v1875 = vunpack.c.l.b16 %v1740
    %v1876 = vunpack.c.l.b16 %v1741
    %v1877 = vunpack.c.l.b16 %v1742
    %v1878 = vunpack.c.l.b16 %v1743
    %v1879 = vunpack.c.l.b16 %v1744
    %v1880 = vunpack.c.l.b16 %v1745
    %v1881 = vunpack.c.l.b16 %v1746
    %v1882 = vunpack.c.l.b16 %v1747
    %v1883 = vunpack.c.l.b16 %v1748
    %v1884 = vunpack.c.l.b16 %v1749
    %v1885 = vunpack.c.l.b16 %v1750
    %v1886 = vunpack.c.l.b16 %v1751
    %v1887 = vunpack.c.l.b16 %v1752
    %v1888 = vpack.c.b16 %v1825, %v1824
    %v1889 = vpack.c.b16 %v1827, %v1826
    %v1890 = vpack.c.b16 %v1829, %v1828
    %v1891 = vpack.c.b16 %v1831, %v1830
    %v1892 = vpack.c.b16 %v1833, %v1832
    %v1893 = vpack.c.b16 %v1835, %v1834
    %v1894 = vpack.c.b16 %v1837, %v1836
    %v1895 = vpack.c.b16 %v1839, %v1838
    %v1896 = vpack.c.b16 %v1841, %v1840
    %v1897 = vpack.c.b16 %v1843, %v1842
    %v1898 = vpack.c.b16 %v1845, %v1844
    %v1899 = vpack.c.b16 %v1847, %v1846
    %v1900 = vpack.c.b16 %v1849, %v1848
    %v1901 = vpack.c.b16 %v1851, %v1850
    %v1902 = vpack.c.b16 %v1853, %v1852
    %v1903 = vpack.c.b16 %v1855, %v1854
    %v1904 = vpack.c.b16 %v1857, %v1856
    %v1905 = vpack.c.b16 %v1859, %v1858
    %v1906 = vpack.c.b16 %v1861, %v1860
    %v1907 = vpack.c.b16 %v1863, %v1862
    %v1908 = vpack.c.b16 %v1865, %v1864
    %v1909 = vpack.c.b16 %v1867, %v1866
    %v1910 = vpack.c.b16 %v1869, %v1868
    %v1911 = vpack.c.b16 %v1871, %v1870
    %v1912 = vpack.c.b16 %v1873, %v1872
    %v1913 = vpack.c.b16 %v1875, %v1874
    %v1914 = vpack.c.b16 %v1877, %v1876
    %v1915 = vpack.c.b16 %v1879, %v1878
    %v1916 = vpack.c.b16 %v1881, %v1880
    %v1917 = vpack.c.b16 %v1883, %v1882
    %v1918 = vpack.c.b16 %v1885, %v1884
    %v1919 = vpack.c.b16 %v1887, %v1886
    %1952 = vmatprep.subr.bf16.mxu0 0
    %1953 = vmatpush1.bf16.msra.mxu0 %v1895
    %1954 = vmatprep.subr.bf16.mxu0 0
    %1955 = vmatpush1.bf16.msra.mxu0 %v1894
    %1956 = vmatprep.subr.bf16.mxu0 0
    %1957 = vmatpush1.bf16.msra.mxu0 %v1893
    %1958 = vmatprep.subr.bf16.mxu0 0
    %1959 = vmatpush1.bf16.msra.mxu0 %v1892
    %1960 = vmatprep.subr.bf16.mxu0 0
    %1961 = vmatpush1.bf16.msra.mxu0 %v1891
    %1962 = vmatprep.subr.bf16.mxu0 0
    %1963 = vmatpush1.bf16.msra.mxu0 %v1890
    %1964 = vmatprep.subr.bf16.mxu0 0
    %1965 = vmatpush1.bf16.msra.mxu0 %v1889
    %1966 = vmatprep.subr.bf16.mxu0 0
    %1967 = vmatpush1.bf16.msra.mxu0 %v1888
    %1968 = vmatprep.subr.bf16.mxu0 0
    %1969 = vmatpush2.bf16.msra.mxu0 %v1903
    %1970 = vmatprep.subr.bf16.mxu0 0
    %1971 = vmatpush2.bf16.msra.mxu0 %v1902
    %1972 = vmatprep.subr.bf16.mxu0 0
    %1973 = vmatpush2.bf16.msra.mxu0 %v1901
    %1974 = vmatprep.subr.bf16.mxu0 0
    %1975 = vmatpush2.bf16.msra.mxu0 %v1900
    %1976 = vmatprep.subr.bf16.mxu0 0
    %1977 = vmatpush2.bf16.msra.mxu0 %v1899
    %1978 = vmatprep.subr.bf16.mxu0 0
    %1979 = vmatpush2.bf16.msra.mxu0 %v1898
    %1980 = vmatprep.subr.bf16.mxu0 0
    %1981 = vmatpush2.bf16.msra.mxu0 %v1897
    %1982 = vmatprep.subr.bf16.mxu0 0
    %1983 = vmatpush2.bf16.msra.mxu0 %v1896
    %1984 = vmatprep.mubr.bf16.mxu0 %v1686
    %1985 = vmatmul.mubr.bf16.gmra.mxu0 %v1685
    %v1986 = vpop.f32.mrf.mxu0
    %v1987 = vadd.f32 %v1758, %v1986
    %v1988 = vpop.f32.mrf.mxu0
    %v1989 = vpop.f32.mrf.mxu0
    %v1990 = vadd.f32 %v1758, %v1989
    %v1991 = vpop.f32.mrf.mxu0
    %1992 = vdwg.mxu0
    %1993 = vmatprep.subr.bf16.mxu0 0
    %1994 = vmatpush1.bf16.msra.mxu0 %v1911
    %1995 = vmatprep.subr.bf16.mxu0 0
    %1996 = vmatpush1.bf16.msra.mxu0 %v1910
    %1997 = vmatprep.subr.bf16.mxu0 0
    %1998 = vmatpush1.bf16.msra.mxu0 %v1909
    %1999 = vmatprep.subr.bf16.mxu0 0
    %2000 = vmatpush1.bf16.msra.mxu0 %v1908
    %2001 = vmatprep.subr.bf16.mxu0 0
    %2002 = vmatpush1.bf16.msra.mxu0 %v1907
    %2003 = vmatprep.subr.bf16.mxu0 0
    %2004 = vmatpush1.bf16.msra.mxu0 %v1906
    %2005 = vmatprep.subr.bf16.mxu0 0
    %2006 = vmatpush1.bf16.msra.mxu0 %v1905
    %2007 = vmatprep.subr.bf16.mxu0 0
    %2008 = vmatpush1.bf16.msra.mxu0 %v1904
    %2009 = vmatprep.subr.bf16.mxu0 0
    %2010 = vmatpush2.bf16.msra.mxu0 %v1919
    %2011 = vmatprep.subr.bf16.mxu0 0
    %2012 = vmatpush2.bf16.msra.mxu0 %v1918
    %2013 = vmatprep.subr.bf16.mxu0 0
    %2014 = vmatpush2.bf16.msra.mxu0 %v1917
    %2015 = vmatprep.subr.bf16.mxu0 0
    %2016 = vmatpush2.bf16.msra.mxu0 %v1916
    %2017 = vmatprep.subr.bf16.mxu0 0
    %2018 = vmatpush2.bf16.msra.mxu0 %v1915
    %2019 = vmatprep.subr.bf16.mxu0 0
    %2020 = vmatpush2.bf16.msra.mxu0 %v1914
    %2021 = vmatprep.subr.bf16.mxu0 0
    %2022 = vmatpush2.bf16.msra.mxu0 %v1913
    %2023 = vmatprep.subr.bf16.mxu0 0
    %2024 = vmatpush2.bf16.msra.mxu0 %v1912
    %2025 = vmatprep.mubr.bf16.mxu0 %v1688
    %2026 = vmatmul.mubr.bf16.gmra.mxu0 %v1687
    %v2027 = vpop.f32.mrf.mxu0
    %v2028 = vadd.f32 %v1987, %v2027
    %v2029 = vpop.f32.mrf.mxu0
    %v2030 = vpop.f32.mrf.mxu0
    %v2031 = vadd.f32 %v1990, %v2030
    %v2032 = vpop.f32.mrf.mxu0
    %2033 = vdwg.mxu0
    %v2034 = vadd.f32 %v1374, %v2028
    %v2035 = vadd.f32 %v1375, %v2031
    %2036 = vst [vmem:[#allocation11] sm:$0xff] %v2034
    %2037 = vst [vmem:[#allocation11 + $0x8] sm:$0xff] %v2035
    // Predicated region
    $region50: #{tpu_custom_call.1} parent=1 // pred_check
      _
    $region51: #{tpu_custom_call.1} parent=1 // pred_check_branch
      %2039 = sbr.rel (0) target = $region53
    $region52: #{tpu_custom_call.1} parent=1 // pred_region
      %s2041 = ssub.s32 256, 256
      %2042 = vsyncadd [#allocation4], %s2041
      %s2043 = sshll.u32 [#allocation11], 4
      %s2044 = int_to_ptr.vmem [resolvable:$true] %s2043
      %2049 = dma.vmem_to_hbm [thread:$0]  %s2044, 256, %s7, [#allocation4], 128, 128, 8
    $region53: #{tpu_custom_call.1} parent=1 // pred_fallthru
      _
    // Predicated region
    $region54: #{tpu_custom_call.1} parent=1 // pred_check
      _
    $region55: #{tpu_custom_call.1} parent=1 // pred_check_branch
      %2051 = sbr.rel (0) target = $region57
    $region56: #{tpu_custom_call.1} parent=1 // pred_region
      %2052 = dma.done [#allocation4], 256
    $region57: #{tpu_custom_call.1} parent=1 // pred_fallthru
      _
    %2053 = vsyncpa [#allocation3], 1
    %2054 = vsyncpa [#allocation6], 1
    %2055 = vsyncpa [#allocation9], 1
    %2056 = vsyncpa [#allocation4], 1

</llo_original>
